<compile_context>
chip_gen: v7x
topology: tpu7x:2x2x1
jax: 0.10.0
libtpu: 0.0.40
codegen_flags: <defaults>
</compile_context>

<pallas_src>
import functools

import jax
import jax.numpy as jnp
from jax.experimental import pallas as pl
from jax.experimental.pallas import tpu as pltpu


# --------------------------------------------------------------------------
# Model hyper-parameters (small synthetic sizes consistent with the module)
# --------------------------------------------------------------------------
VOCAB_SIZE = 50
EMBED_DIM = 32            # embedding_dim
NUM_FILTERS = 32          # num_filters
FILTER_SIZES = (2, 3, 4, 5)
N_FS = len(FILTER_SIZES)
C = N_FS * NUM_FILTERS    # 128 fused conv output channels (lane-dense)
OUTPUT_DIM = 2
PAD_INDEX = 0
BATCH = 2
SEQ_LEN = 8

SUBLANE, LANE = 8, 128
MAX_FS = max(FILTER_SIZES)            # 5
BP = 8                                # batch padded to one sublane tile
LP = 16                               # seq padded: >= L + MAX_FS - 1, mult of 8
N_ROWS = BP * LP                      # 128  (conv matmul M dimension)
KC = MAX_FS * VOCAB_SIZE              # 250  fused (tap, vocab) contraction
KC_PAD = 256                          # padded to a lane multiple

assert LP >= SEQ_LEN + MAX_FS - 1 and LP % SUBLANE == 0
assert N_ROWS == 128 and C == 128


# --------------------------------------------------------------------------
# Pallas kernel: fused embed+conv (single matmul) + ReLU + masked max-over-
# time + fc1 + ReLU + fc2 (dropout is identity at inference time).
# --------------------------------------------------------------------------
def _cnn_kernel(lp, max_fs,
                cids_ref,    # [MAX_FS, N, 1] int32: token id + k*V for tap k
                wbig_ref,    # [KC_PAD, C]    f32 : emb @ tap-k weights, stacked
                params_ref,  # [8, 128]       f32 : r0 cbias, r1 valid_len,
                             #                       r2 fc1 bias, r3 fc2 bias
                fc1w_ref,    # [C, 128]       f32 : zero-padded fc1 weight
                fc2w_ref,    # [128, 128]     f32 : zero-padded fc2 weight
                out_ref):    # [BP, 128]      f32 : zero-padded logits
    n = cids_ref.shape[1]
    kc, c = wbig_ref.shape
    bp = n // lp

    # Stacked one-hot over the fused (tap, vocab) contracting axis, built
    # in-kernel from the tiny combined-id operand (no [N, KC] HBM traffic,
    # no misaligned shifted slices).
    lane_iota = jax.lax.broadcasted_iota(jnp.int32, (n, kc), 1)
    hit = cids_ref[0] == lane_iota                     # [N,1] bcast vs [N,KC]
    for k in range(1, max_fs):
        hit = jnp.logical_or(hit, cids_ref[k] == lane_iota)
    onehot = hit.astype(jnp.float32)                   # [N, KC_PAD]

    # ONE matmul = embedding gather + every tap of every filter bank (K=256).
    s = jnp.dot(onehot, wbig_ref[...],
                preferred_element_type=jnp.float32)    # [N, C]
    conv = jnp.maximum(s + params_ref[0:1, :], 0.0)    # bias + ReLU

    # In-kernel validity mask (per-channel valid conv length), applied as a
    # -inf fill before the max so pooling matches the reference exactly.
    t_idx = jax.lax.broadcasted_iota(jnp.int32, (n, c), 0) % lp
    valid = t_idx.astype(jnp.float32) < params_ref[1:2, :]
    conv = jnp.where(valid, conv, jnp.float32(-1e30))

    # Max-over-time: Lp=16 keeps this reshape tile-aligned.
    pooled = jnp.max(conv.reshape(bp, lp, c), axis=1)  # [BP, C]

    # MLP head (dropout == identity at inference).
    h = jnp.dot(pooled, fc1w_ref[...], preferred_element_type=jnp.float32)
    h = jnp.maximum(h + params_ref[2:3, :], 0.0)       # [BP, 128]
    logits = jnp.dot(h, fc2w_ref[...], preferred_element_type=jnp.float32)
    out_ref[...] = logits + params_ref[3:4, :]         # [BP, 128]


# --------------------------------------------------------------------------
# One-time weight packing (hoisted out of the per-call hot path).
# --------------------------------------------------------------------------
def pack_params(emb, conv_ws, conv_bs, fc1w, fc1b, fc2w, fc2b,
                seq_len=SEQ_LEN, filter_sizes=FILTER_SIZES):
    """Fold embedding + conv taps into one [KC_PAD, C] weight; pack biases."""
    wbig = jnp.zeros((KC_PAD, C), jnp.float32)
    for k in range(MAX_FS):
        # Tap-k weights of all banks side by side (zero cols if fs <= k).
        cols = [conv_ws[fi][k] if k < fs
                else jnp.zeros((EMBED_DIM, NUM_FILTERS), jnp.float32)
                for fi, fs in enumerate(filter_sizes)]
        w_tap_k = jnp.concatenate(cols, axis=1)                   # [E, C]
        mk = jnp.dot(emb, w_tap_k)                                # [V, C]
        wbig = wbig.at[k * VOCAB_SIZE:(k + 1) * VOCAB_SIZE].set(mk)

    cbias = jnp.concatenate(conv_bs, axis=1)[0]                   # [C]
    valid_len = jnp.concatenate(
        [jnp.full((NUM_FILTERS,), seq_len - fs + 1, jnp.float32)
         for fs in filter_sizes])                                 # [C]

    params = jnp.zeros((SUBLANE, LANE), jnp.float32)
    params = params.at[0, :C].set(cbias)
    params = params.at[1, :C].set(valid_len)
    params = params.at[2, :NUM_FILTERS].set(fc1b[0])
    params = params.at[3, :OUTPUT_DIM].set(fc2b[0])

    fc1w_p = jnp.zeros((C, LANE), jnp.float32).at[:, :NUM_FILTERS].set(fc1w)
    fc2w_p = (jnp.zeros((LANE, LANE), jnp.float32)
              .at[:NUM_FILTERS, :OUTPUT_DIM].set(fc2w))
    return wbig, params, fc1w_p, fc2w_p


# --------------------------------------------------------------------------
# Forward: only tiny id plumbing happens per call, then one pallas_call.
# --------------------------------------------------------------------------
@jax.jit
def cnn_forward(ids, wbig, params, fc1w_p, fc2w_p):
    """ids: [B, L] int32 token ids -> logits [B, OUTPUT_DIM] float32."""
    B, L = ids.shape

    # Flat (batch-major) layout with per-sequence padding; trailing PAD rows
    # keep every tap's shifted read in range.  Combined id = token + k*V so
    # the stacked one-hot indexes the fused contracting axis directly.
    ids_pad = jnp.full((BP, LP), PAD_INDEX, jnp.int32).at[:B, :L].set(ids)
    ids_ext = jnp.concatenate(
        [ids_pad.reshape(N_ROWS),
         jnp.full((MAX_FS - 1,), PAD_INDEX, jnp.int32)])
    cids = jnp.stack([ids_ext[k:k + N_ROWS] + k * VOCAB_SIZE
                      for k in range(MAX_FS)], axis=0)            # [MAX_FS, N]
    cids = cids.reshape(MAX_FS, N_ROWS, 1)

    flops = (2 * N_ROWS * KC_PAD * C        # fused embed+conv matmul
             + 2 * BP * C * LANE            # fc1
             + 2 * BP * LANE * LANE)        # fc2
    bytes_accessed = 4 * (MAX_FS * N_ROWS + KC_PAD * C + SUBLANE * LANE
                          + C * LANE + LANE * LANE + BP * LANE)

    vmem = pl.BlockSpec(memory_space=pltpu.MemorySpace.VMEM)
    kernel = functools.partial(_cnn_kernel, LP, MAX_FS)
    logits_pad = pl.pallas_call(
        kernel,
        out_shape=jax.ShapeDtypeStruct((BP, LANE), jnp.float32),
        in_specs=[vmem] * 5,
        out_specs=vmem,
        compiler_params=pltpu.CompilerParams(
            vmem_limit_bytes=8 * 1024 * 1024),
        cost_estimate=pl.CostEstimate(flops=flops, transcendentals=0,
                                      bytes_accessed=bytes_accessed),
    )(cids, wbig, params, fc1w_p, fc2w_p)
    return logits_pad[:B, :OUTPUT_DIM]


# --------------------------------------------------------------------------
# Deterministic parameter initialization (mirrors _init_weights shapes)
# --------------------------------------------------------------------------
def init_params(key):
    keys = jax.random.split(key, 2 + len(FILTER_SIZES))
    # Embedding ~ N(0, 0.1), padding row zeroed (padding_idx semantics).
    emb = 0.1 * jax.random.normal(keys[0], (VOCAB_SIZE, EMBED_DIM), jnp.float32)
    emb = emb.at[PAD_INDEX].set(0.0)

    conv_ws, conv_bs = [], []
    for i, fs in enumerate(FILTER_SIZES):
        fan_in, fan_out = EMBED_DIM * fs, NUM_FILTERS * fs
        bound = (6.0 / (fan_in + fan_out)) ** 0.5
        # stored as [fs, E, F]  (torch Conv1d weight is [F, E, fs])
        w = jax.random.uniform(keys[1 + i], (fs, EMBED_DIM, NUM_FILTERS),
                               jnp.float32, -bound, bound)
        conv_ws.append(w)
        conv_bs.append(jnp.zeros((1, NUM_FILTERS), jnp.float32))

    kfc = jax.random.split(keys[-1], 2)
    in1 = len(FILTER_SIZES) * NUM_FILTERS
    b1 = (6.0 / (in1 + NUM_FILTERS)) ** 0.5
    fc1w = jax.random.uniform(kfc[0], (in1, NUM_FILTERS), jnp.float32, -b1, b1)
    fc1b = jnp.zeros((1, NUM_FILTERS), jnp.float32)
    b2 = (6.0 / (NUM_FILTERS + OUTPUT_DIM)) ** 0.5
    fc2w = jax.random.uniform(kfc[1], (NUM_FILTERS, OUTPUT_DIM), jnp.float32,
                              -b2, b2)
    fc2b = jnp.zeros((1, OUTPUT_DIM), jnp.float32)
    return emb, conv_ws, conv_bs, fc1w, fc1b, fc2w, fc2b


# --------------------------------------------------------------------------
# Pure-JAX reference (sanity check)
# --------------------------------------------------------------------------
def reference_forward(ids, emb_table, conv_ws, conv_bs, fc1w, fc1b, fc2w, fc2b,
                      filter_sizes=FILTER_SIZES):
    embedded = emb_table[ids]                                  # [B, L, E]
    B, L, _ = embedded.shape
    pooled = []
    for fs, w, b in zip(filter_sizes, conv_ws, conv_bs):
        T = L - fs + 1
        acc = jnp.zeros((B, T, NUM_FILTERS), jnp.float32)
        for k in range(fs):
            acc = acc + jnp.einsum('ble,ef->blf', embedded[:, k:k + T, :], w[k])
        acc = jnp.maximum(acc + b[None, :, :], 0.0)
        pooled.append(jnp.max(acc, axis=1))
    feats = jnp.concatenate(pooled, axis=1)
    h = jnp.maximum(feats @ fc1w + fc1b, 0.0)
    return h @ fc2w + fc2b


if __name__ == "__main__":
    key = jax.random.PRNGKey(0)
    k_param, k_ids = jax.random.split(key)

    emb, conv_ws, conv_bs, fc1w, fc1b, fc2w, fc2b = init_params(k_param)

    # Input token ids [batch, seq_len]
    ids = jax.random.randint(k_ids, (BATCH, SEQ_LEN), 0, VOCAB_SIZE,
                             dtype=jnp.int32)

    # Pre-pack weights ONCE (outside the per-call hot path).
    packed = pack_params(emb, conv_ws, conv_bs, fc1w, fc1b, fc2w, fc2b)

    logits = jax.block_until_ready(cnn_forward(ids, *packed))

    ref = reference_forward(ids, emb, conv_ws, conv_bs, fc1w, fc1b, fc2w, fc2b)
    assert logits.shape == (BATCH, OUTPUT_DIM)
    assert jnp.allclose(logits, ref, atol=1e-4, rtol=1e-4)

    print("KERNEL_OK")
</pallas_src>

<mosaic_0001>
module attributes {stable_mosaic.version = 11 : i64} {
  func.func @_cnn_kernel(%arg0: memref<5x128x1xi32, #tpu.memory_space<vmem>>, %arg1: memref<256x128xf32, #tpu.memory_space<vmem>>, %arg2: memref<8x128xf32, #tpu.memory_space<vmem>>, %arg3: memref<128x128xf32, #tpu.memory_space<vmem>>, %arg4: memref<128x128xf32, #tpu.memory_space<vmem>>, %arg5: memref<8x128xf32, #tpu.memory_space<vmem>>) attributes {dimension_semantics = [], scalar_prefetch = 0 : i64, scratch_operands = 0 : i64, tpu.core_type = #tpu.core_type<tc>} {
    %0 = tpu.iota {dimensions = array<i32: 1>} : vector<128x256xi32>
    %c0 = arith.constant 0 : index
    %c0_0 = arith.constant 0 : index
    %c0_1 = arith.constant 0 : index
    %1 = vector.load %arg0[%c0, %c0_0, %c0_1] : memref<5x128x1xi32, #tpu.memory_space<vmem>>, vector<1x128x1xi32>
    %2 = vector.shape_cast %1 : vector<1x128x1xi32> to vector<128x1xi32>
    %3 = vector.broadcast %2 : vector<128x1xi32> to vector<128x256xi32>
    %4 = arith.cmpi eq, %3, %0 : vector<128x256xi32>
    %c1 = arith.constant 1 : index
    %c0_2 = arith.constant 0 : index
    %c0_3 = arith.constant 0 : index
    %5 = vector.load %arg0[%c1, %c0_2, %c0_3] : memref<5x128x1xi32, #tpu.memory_space<vmem>>, vector<1x128x1xi32>
    %6 = vector.shape_cast %5 : vector<1x128x1xi32> to vector<128x1xi32>
    %7 = vector.broadcast %6 : vector<128x1xi32> to vector<128x256xi32>
    %8 = arith.cmpi eq, %7, %0 : vector<128x256xi32>
    %9 = arith.ori %4, %8 : vector<128x256xi1>
    %c2 = arith.constant 2 : index
    %c0_4 = arith.constant 0 : index
    %c0_5 = arith.constant 0 : index
    %10 = vector.load %arg0[%c2, %c0_4, %c0_5] : memref<5x128x1xi32, #tpu.memory_space<vmem>>, vector<1x128x1xi32>
    %11 = vector.shape_cast %10 : vector<1x128x1xi32> to vector<128x1xi32>
    %12 = vector.broadcast %11 : vector<128x1xi32> to vector<128x256xi32>
    %13 = arith.cmpi eq, %12, %0 : vector<128x256xi32>
    %14 = arith.ori %9, %13 : vector<128x256xi1>
    %c3 = arith.constant 3 : index
    %c0_6 = arith.constant 0 : index
    %c0_7 = arith.constant 0 : index
    %15 = vector.load %arg0[%c3, %c0_6, %c0_7] : memref<5x128x1xi32, #tpu.memory_space<vmem>>, vector<1x128x1xi32>
    %16 = vector.shape_cast %15 : vector<1x128x1xi32> to vector<128x1xi32>
    %17 = vector.broadcast %16 : vector<128x1xi32> to vector<128x256xi32>
    %18 = arith.cmpi eq, %17, %0 : vector<128x256xi32>
    %19 = arith.ori %14, %18 : vector<128x256xi1>
    %c4 = arith.constant 4 : index
    %c0_8 = arith.constant 0 : index
    %c0_9 = arith.constant 0 : index
    %20 = vector.load %arg0[%c4, %c0_8, %c0_9] : memref<5x128x1xi32, #tpu.memory_space<vmem>>, vector<1x128x1xi32>
    %21 = vector.shape_cast %20 : vector<1x128x1xi32> to vector<128x1xi32>
    %22 = vector.broadcast %21 : vector<128x1xi32> to vector<128x256xi32>
    %23 = arith.cmpi eq, %22, %0 : vector<128x256xi32>
    %24 = arith.ori %19, %23 : vector<128x256xi1>
    %25 = arith.extui %24 : vector<128x256xi1> to vector<128x256xi32>
    %26 = arith.sitofp %25 : vector<128x256xi32> to vector<128x256xf32>
    %c0_10 = arith.constant 0 : index
    %c0_11 = arith.constant 0 : index
    %27 = vector.load %arg1[%c0_10, %c0_11] : memref<256x128xf32, #tpu.memory_space<vmem>>, vector<256x128xf32>
    %cst = arith.constant dense<0.000000e+00> : vector<128x128xf32>
    %28 = tpu.matmul %26, %27, %cst {dimension_numbers = #tpu.dot_dimension_numbers<[1], [0], [0], [1], [0, 0, 1, 1], [], []>} : vector<128x256xf32>, vector<256x128xf32>, vector<128x128xf32> -> vector<128x128xf32>
    %c0_12 = arith.constant 0 : index
    %c0_13 = arith.constant 0 : index
    %29 = vector.load %arg2[%c0_12, %c0_13] : memref<8x128xf32, #tpu.memory_space<vmem>>, vector<1x128xf32>
    %30 = vector.broadcast %29 : vector<1x128xf32> to vector<128x128xf32>
    %31 = arith.addf %28, %30 : vector<128x128xf32>
    %cst_14 = arith.constant 0.000000e+00 : f32
    %32 = vector.broadcast %cst_14 : f32 to vector<128x128xf32>
    %33 = arith.maximumf %31, %32 : vector<128x128xf32>
    %34 = tpu.iota {dimensions = array<i32: 0>} : vector<128x128xi32>
    %c16_i32 = arith.constant 16 : i32
    %c0_i32 = arith.constant 0 : i32
    %35 = arith.cmpi eq, %c16_i32, %c0_i32 : i32
    %c1_i32 = arith.constant 1 : i32
    %36 = arith.select %35, %c1_i32, %c16_i32 : i32
    %37 = vector.broadcast %36 : i32 to vector<128x128xi32>
    %38 = arith.remsi %34, %37 : vector<128x128xi32>
    %c0_i32_15 = arith.constant 0 : i32
    %39 = vector.broadcast %c0_i32_15 : i32 to vector<128x128xi32>
    %40 = arith.cmpi ne, %38, %39 : vector<128x128xi32>
    %c0_i32_16 = arith.constant 0 : i32
    %41 = vector.broadcast %c0_i32_16 : i32 to vector<128x128xi32>
    %42 = arith.cmpi slt, %38, %41 : vector<128x128xi32>
    %c0_i32_17 = arith.constant 0 : i32
    %43 = arith.cmpi slt, %36, %c0_i32_17 : i32
    %44 = vector.broadcast %43 : i1 to vector<128x128xi1>
    %45 = vector.broadcast %44 : vector<128x128xi1> to vector<128x128xi1>
    %46 = arith.xori %42, %45 : vector<128x128xi1>
    %47 = arith.andi %46, %40 : vector<128x128xi1>
    %48 = vector.broadcast %36 : i32 to vector<128x128xi32>
    %49 = arith.addi %38, %48 : vector<128x128xi32>
    %50 = arith.select %47, %49, %38 : vector<128x128xi1>, vector<128x128xi32>
    %51 = arith.sitofp %50 : vector<128x128xi32> to vector<128x128xf32>
    %c1_18 = arith.constant 1 : index
    %c0_19 = arith.constant 0 : index
    %52 = vector.load %arg2[%c1_18, %c0_19] : memref<8x128xf32, #tpu.memory_space<vmem>>, vector<1x128xf32>
    %53 = vector.broadcast %52 : vector<1x128xf32> to vector<128x128xf32>
    %54 = arith.cmpf olt, %51, %53 : vector<128x128xf32>
    %cst_20 = arith.constant -1.000000e+30 : f32
    %55 = vector.broadcast %cst_20 : f32 to vector<128x128xf32>
    %56 = arith.select %54, %33, %55 : vector<128x128xi1>, vector<128x128xf32>
    %57 = vector.shape_cast %56 : vector<128x128xf32> to vector<8x16x128xf32>
    %cst_21 = arith.constant dense<0xFF800000> : vector<8x128xf32>
    %58 = vector.multi_reduction <maximumf>, %57, %cst_21 [1] : vector<8x16x128xf32> to vector<8x128xf32>
    %c0_22 = arith.constant 0 : index
    %c0_23 = arith.constant 0 : index
    %59 = vector.load %arg3[%c0_22, %c0_23] : memref<128x128xf32, #tpu.memory_space<vmem>>, vector<128x128xf32>
    %cst_24 = arith.constant dense<0.000000e+00> : vector<8x128xf32>
    %60 = tpu.matmul %58, %59, %cst_24 {dimension_numbers = #tpu.dot_dimension_numbers<[1], [0], [0], [1], [0, 0, 1, 1], [], []>} : vector<8x128xf32>, vector<128x128xf32>, vector<8x128xf32> -> vector<8x128xf32>
    %c2_25 = arith.constant 2 : index
    %c0_26 = arith.constant 0 : index
    %61 = vector.load %arg2[%c2_25, %c0_26] : memref<8x128xf32, #tpu.memory_space<vmem>>, vector<1x128xf32>
    %62 = vector.broadcast %61 : vector<1x128xf32> to vector<8x128xf32>
    %63 = arith.addf %60, %62 : vector<8x128xf32>
    %cst_27 = arith.constant 0.000000e+00 : f32
    %64 = vector.broadcast %cst_27 : f32 to vector<8x128xf32>
    %65 = arith.maximumf %63, %64 : vector<8x128xf32>
    %c0_28 = arith.constant 0 : index
    %c0_29 = arith.constant 0 : index
    %66 = vector.load %arg4[%c0_28, %c0_29] : memref<128x128xf32, #tpu.memory_space<vmem>>, vector<128x128xf32>
    %cst_30 = arith.constant dense<0.000000e+00> : vector<8x128xf32>
    %67 = tpu.matmul %65, %66, %cst_30 {dimension_numbers = #tpu.dot_dimension_numbers<[1], [0], [0], [1], [0, 0, 1, 1], [], []>} : vector<8x128xf32>, vector<128x128xf32>, vector<8x128xf32> -> vector<8x128xf32>
    %c3_31 = arith.constant 3 : index
    %c0_32 = arith.constant 0 : index
    %68 = vector.load %arg2[%c3_31, %c0_32] : memref<8x128xf32, #tpu.memory_space<vmem>>, vector<1x128xf32>
    %69 = vector.broadcast %68 : vector<1x128xf32> to vector<8x128xf32>
    %70 = arith.addf %67, %69 : vector<8x128xf32>
    %c0_33 = arith.constant 0 : index
    %c0_34 = arith.constant 0 : index
    %71 = vector.load %arg5[%c0_33, %c0_34] : memref<8x128xf32, #tpu.memory_space<vmem>>, vector<8x128xf32>
    tpu.vector_store %arg5[%c0_33, %c0_34], %70 {strides = array<i32>} : memref<8x128xf32, #tpu.memory_space<vmem>>, vector<8x128xf32>,
    return
  }
}

</mosaic_0001>

<llo_original>
// kernel: cnn_forward.1
$region0: #{cnn_forward.1}
  #allocation0 [shape = 'u32[]', space=smem, size = 0x4, offset = 0x4, fixed_abs, tag = 'smem constant byte address 0x4 - core index']
  #allocation1 [shape = 'u32[144,128]{1,0:T(1,128)}', space=vmem, size = 0x12000, scoped, tag = 'internal scratch']
  %s0 = inlined_call_operand.vmem [shape: s32[5,128,1], index: 0, kind: input, shape index: {}]
  %s1 = inlined_call_operand.vmem [shape: f32[256,128], index: 1, kind: input, shape index: {}]
  %s2 = inlined_call_operand.vmem [shape: f32[8,128], index: 2, kind: input, shape index: {}]
  %s3 = inlined_call_operand.vmem [shape: f32[128,128], index: 3, kind: input, shape index: {}]
  %s4 = inlined_call_operand.vmem [shape: f32[128,128], index: 4, kind: input, shape index: {}]
  %s5 = inlined_call_operand.vmem [shape: f32[8,128], index: 5, kind: output, shape index: {}]
  %s6 = sld [smem:[#allocation0]]
  $region30: #{cnn_forward.1} parent=0
    _
  %s8 = ssub.s32 1, %s6
  %s9 = scalar_select 0, %s8, %s6
  // Predicated region
  $region2: #{cnn_forward.1} parent=0 // pred_check
    _
  $region3: #{cnn_forward.1} parent=0 // pred_check_branch
    %11 = sbr.rel (0) target = $region5
  $region4: #{cnn_forward.1} parent=0 // pred_region
    _
  $region5: #{cnn_forward.1} parent=0 // pred_fallthru
    _
  // Predicated region
  $region6: #{cnn_forward.1} parent=0 // pred_check
    _
  $region7: #{cnn_forward.1} parent=0 // pred_check_branch
    %13 = sbr.rel (0) target = $region9
  $region8: #{cnn_forward.1} parent=0 // pred_region
    _
  $region9: #{cnn_forward.1} parent=0 // pred_fallthru
    _
  // Predicated region
  $region10: #{cnn_forward.1} parent=0 // pred_check
    _
  $region11: #{cnn_forward.1} parent=0 // pred_check_branch
    %15 = sbr.rel (0) target = $region13
  $region12: #{cnn_forward.1} parent=0 // pred_region
    _
  $region13: #{cnn_forward.1} parent=0 // pred_fallthru
    _
  // Predicated region
  $region14: #{cnn_forward.1} parent=0 // pred_check
    _
  $region15: #{cnn_forward.1} parent=0 // pred_check_branch
    %17 = sbr.rel (0) target = $region17
  $region16: #{cnn_forward.1} parent=0 // pred_region
    _
  $region17: #{cnn_forward.1} parent=0 // pred_fallthru
    _
  // Predicated region
  $region18: #{cnn_forward.1} parent=0 // pred_check
    _
  $region19: #{cnn_forward.1} parent=0 // pred_check_branch
    %19 = sbr.rel (0) target = $region21
  $region20: #{cnn_forward.1} parent=0 // pred_region
    _
  $region21: #{cnn_forward.1} parent=0 // pred_fallthru
    _
  %v20 = vlaneseq
  %v21 = vand.u32 %v20, 127
  %v22 = vadd.s32 %v21, 128
  %v23 = vld [vmem:[%s0] sm:$0xff]
  %v24 = vld [vmem:[%s0 + $0x8] sm:$0xff]
  %v25 = vld [vmem:[%s0 + $0x10] sm:$0xff]
  %v26 = vld [vmem:[%s0 + $0x18] sm:$0xff]
  %v27 = vld [vmem:[%s0 + $0x20] sm:$0xff]
  %v28 = vld [vmem:[%s0 + $0x28] sm:$0xff]
  %v29 = vld [vmem:[%s0 + $0x30] sm:$0xff]
  %v30 = vld [vmem:[%s0 + $0x38] sm:$0xff]
  %v31 = vld [vmem:[%s0 + $0x40] sm:$0xff]
  %v32 = vld [vmem:[%s0 + $0x48] sm:$0xff]
  %v33 = vld [vmem:[%s0 + $0x50] sm:$0xff]
  %v34 = vld [vmem:[%s0 + $0x58] sm:$0xff]
  %v35 = vld [vmem:[%s0 + $0x60] sm:$0xff]
  %v36 = vld [vmem:[%s0 + $0x68] sm:$0xff]
  %v37 = vld [vmem:[%s0 + $0x70] sm:$0xff]
  %v38 = vld [vmem:[%s0 + $0x78] sm:$0xff]
  %39 = vset.pattern.permute.xlu0 0
  %40 = vperm.xlu0 %39, %v23
  %v41 = vpop.permute.xlu0 %40
  %42 = vset.pattern.permute.xlu0 0
  %43 = vperm.xlu0 %42, %v24
  %v44 = vpop.permute.xlu0 %43
  %45 = vset.pattern.permute.xlu0 0
  %46 = vperm.xlu0 %45, %v25
  %v47 = vpop.permute.xlu0 %46
  %48 = vset.pattern.permute.xlu0 0
  %49 = vperm.xlu0 %48, %v26
  %v50 = vpop.permute.xlu0 %49
  %51 = vset.pattern.permute.xlu0 0
  %52 = vperm.xlu0 %51, %v27
  %v53 = vpop.permute.xlu0 %52
  %54 = vset.pattern.permute.xlu0 0
  %55 = vperm.xlu0 %54, %v28
  %v56 = vpop.permute.xlu0 %55
  %57 = vset.pattern.permute.xlu0 0
  %58 = vperm.xlu0 %57, %v29
  %v59 = vpop.permute.xlu0 %58
  %60 = vset.pattern.permute.xlu0 0
  %61 = vperm.xlu0 %60, %v30
  %v62 = vpop.permute.xlu0 %61
  %63 = vset.pattern.permute.xlu0 0
  %64 = vperm.xlu0 %63, %v31
  %v65 = vpop.permute.xlu0 %64
  %66 = vset.pattern.permute.xlu0 0
  %67 = vperm.xlu0 %66, %v32
  %v68 = vpop.permute.xlu0 %67
  %69 = vset.pattern.permute.xlu0 0
  %70 = vperm.xlu0 %69, %v33
  %v71 = vpop.permute.xlu0 %70
  %72 = vset.pattern.permute.xlu0 0
  %73 = vperm.xlu0 %72, %v34
  %v74 = vpop.permute.xlu0 %73
  %75 = vset.pattern.permute.xlu0 0
  %76 = vperm.xlu0 %75, %v35
  %v77 = vpop.permute.xlu0 %76
  %78 = vset.pattern.permute.xlu0 0
  %79 = vperm.xlu0 %78, %v36
  %v80 = vpop.permute.xlu0 %79
  %81 = vset.pattern.permute.xlu0 0
  %82 = vperm.xlu0 %81, %v37
  %v83 = vpop.permute.xlu0 %82
  %84 = vset.pattern.permute.xlu0 0
  %85 = vperm.xlu0 %84, %v38
  %v86 = vpop.permute.xlu0 %85
  %vm87 = vcmp.eq.s32.totalorder %v41, %v21
  %vm88 = vcmp.eq.s32.totalorder %v41, %v22
  %vm89 = vcmp.eq.s32.totalorder %v44, %v21
  %vm90 = vcmp.eq.s32.totalorder %v44, %v22
  %vm91 = vcmp.eq.s32.totalorder %v47, %v21
  %vm92 = vcmp.eq.s32.totalorder %v47, %v22
  %vm93 = vcmp.eq.s32.totalorder %v50, %v21
  %vm94 = vcmp.eq.s32.totalorder %v50, %v22
  %vm95 = vcmp.eq.s32.totalorder %v53, %v21
  %vm96 = vcmp.eq.s32.totalorder %v53, %v22
  %vm97 = vcmp.eq.s32.totalorder %v56, %v21
  %vm98 = vcmp.eq.s32.totalorder %v56, %v22
  %vm99 = vcmp.eq.s32.totalorder %v59, %v21
  %vm100 = vcmp.eq.s32.totalorder %v59, %v22
  %vm101 = vcmp.eq.s32.totalorder %v62, %v21
  %vm102 = vcmp.eq.s32.totalorder %v62, %v22
  %vm103 = vcmp.eq.s32.totalorder %v65, %v21
  %vm104 = vcmp.eq.s32.totalorder %v65, %v22
  %vm105 = vcmp.eq.s32.totalorder %v68, %v21
  %vm106 = vcmp.eq.s32.totalorder %v68, %v22
  %vm107 = vcmp.eq.s32.totalorder %v71, %v21
  %vm108 = vcmp.eq.s32.totalorder %v71, %v22
  %vm109 = vcmp.eq.s32.totalorder %v74, %v21
  %vm110 = vcmp.eq.s32.totalorder %v74, %v22
  %vm111 = vcmp.eq.s32.totalorder %v77, %v21
  %vm112 = vcmp.eq.s32.totalorder %v77, %v22
  %vm113 = vcmp.eq.s32.totalorder %v80, %v21
  %vm114 = vcmp.eq.s32.totalorder %v80, %v22
  %vm115 = vcmp.eq.s32.totalorder %v83, %v21
  %vm116 = vcmp.eq.s32.totalorder %v83, %v22
  %vm117 = vcmp.eq.s32.totalorder %v86, %v21
  %vm118 = vcmp.eq.s32.totalorder %v86, %v22
  %s119 = scalar_lea.vmem %s0, 128
  %v120 = vld [vmem:[%s119] sm:$0xff]
  %v121 = vld [vmem:[%s119 + $0x8] sm:$0xff]
  %v122 = vld [vmem:[%s119 + $0x10] sm:$0xff]
  %v123 = vld [vmem:[%s119 + $0x18] sm:$0xff]
  %v124 = vld [vmem:[%s119 + $0x20] sm:$0xff]
  %v125 = vld [vmem:[%s119 + $0x28] sm:$0xff]
  %v126 = vld [vmem:[%s119 + $0x30] sm:$0xff]
  %v127 = vld [vmem:[%s119 + $0x38] sm:$0xff]
  %v128 = vld [vmem:[%s119 + $0x40] sm:$0xff]
  %v129 = vld [vmem:[%s119 + $0x48] sm:$0xff]
  %v130 = vld [vmem:[%s119 + $0x50] sm:$0xff]
  %v131 = vld [vmem:[%s119 + $0x58] sm:$0xff]
  %v132 = vld [vmem:[%s119 + $0x60] sm:$0xff]
  %v133 = vld [vmem:[%s119 + $0x68] sm:$0xff]
  %v134 = vld [vmem:[%s119 + $0x70] sm:$0xff]
  %v135 = vld [vmem:[%s119 + $0x78] sm:$0xff]
  %136 = vset.pattern.permute.xlu0 0
  %137 = vperm.xlu0 %136, %v120
  %v138 = vpop.permute.xlu0 %137
  %139 = vset.pattern.permute.xlu0 0
  %140 = vperm.xlu0 %139, %v121
  %v141 = vpop.permute.xlu0 %140
  %142 = vset.pattern.permute.xlu0 0
  %143 = vperm.xlu0 %142, %v122
  %v144 = vpop.permute.xlu0 %143
  %145 = vset.pattern.permute.xlu0 0
  %146 = vperm.xlu0 %145, %v123
  %v147 = vpop.permute.xlu0 %146
  %148 = vset.pattern.permute.xlu0 0
  %149 = vperm.xlu0 %148, %v124
  %v150 = vpop.permute.xlu0 %149
  %151 = vset.pattern.permute.xlu0 0
  %152 = vperm.xlu0 %151, %v125
  %v153 = vpop.permute.xlu0 %152
  %154 = vset.pattern.permute.xlu0 0
  %155 = vperm.xlu0 %154, %v126
  %v156 = vpop.permute.xlu0 %155
  %157 = vset.pattern.permute.xlu0 0
  %158 = vperm.xlu0 %157, %v127
  %v159 = vpop.permute.xlu0 %158
  %160 = vset.pattern.permute.xlu0 0
  %161 = vperm.xlu0 %160, %v128
  %v162 = vpop.permute.xlu0 %161
  %163 = vset.pattern.permute.xlu0 0
  %164 = vperm.xlu0 %163, %v129
  %v165 = vpop.permute.xlu0 %164
  %166 = vset.pattern.permute.xlu0 0
  %167 = vperm.xlu0 %166, %v130
  %v168 = vpop.permute.xlu0 %167
  %169 = vset.pattern.permute.xlu0 0
  %170 = vperm.xlu0 %169, %v131
  %v171 = vpop.permute.xlu0 %170
  %172 = vset.pattern.permute.xlu0 0
  %173 = vperm.xlu0 %172, %v132
  %v174 = vpop.permute.xlu0 %173
  %175 = vset.pattern.permute.xlu0 0
  %176 = vperm.xlu0 %175, %v133
  %v177 = vpop.permute.xlu0 %176
  %178 = vset.pattern.permute.xlu0 0
  %179 = vperm.xlu0 %178, %v134
  %v180 = vpop.permute.xlu0 %179
  %181 = vset.pattern.permute.xlu0 0
  %182 = vperm.xlu0 %181, %v135
  %v183 = vpop.permute.xlu0 %182
  %vm184 = vcmp.eq.s32.totalorder %v138, %v21
  %vm185 = vcmp.eq.s32.totalorder %v138, %v22
  %vm186 = vcmp.eq.s32.totalorder %v141, %v21
  %vm187 = vcmp.eq.s32.totalorder %v141, %v22
  %vm188 = vcmp.eq.s32.totalorder %v144, %v21
  %vm189 = vcmp.eq.s32.totalorder %v144, %v22
  %vm190 = vcmp.eq.s32.totalorder %v147, %v21
  %vm191 = vcmp.eq.s32.totalorder %v147, %v22
  %vm192 = vcmp.eq.s32.totalorder %v150, %v21
  %vm193 = vcmp.eq.s32.totalorder %v150, %v22
  %vm194 = vcmp.eq.s32.totalorder %v153, %v21
  %vm195 = vcmp.eq.s32.totalorder %v153, %v22
  %vm196 = vcmp.eq.s32.totalorder %v156, %v21
  %vm197 = vcmp.eq.s32.totalorder %v156, %v22
  %vm198 = vcmp.eq.s32.totalorder %v159, %v21
  %vm199 = vcmp.eq.s32.totalorder %v159, %v22
  %vm200 = vcmp.eq.s32.totalorder %v162, %v21
  %vm201 = vcmp.eq.s32.totalorder %v162, %v22
  %vm202 = vcmp.eq.s32.totalorder %v165, %v21
  %vm203 = vcmp.eq.s32.totalorder %v165, %v22
  %vm204 = vcmp.eq.s32.totalorder %v168, %v21
  %vm205 = vcmp.eq.s32.totalorder %v168, %v22
  %vm206 = vcmp.eq.s32.totalorder %v171, %v21
  %vm207 = vcmp.eq.s32.totalorder %v171, %v22
  %vm208 = vcmp.eq.s32.totalorder %v174, %v21
  %vm209 = vcmp.eq.s32.totalorder %v174, %v22
  %vm210 = vcmp.eq.s32.totalorder %v177, %v21
  %vm211 = vcmp.eq.s32.totalorder %v177, %v22
  %vm212 = vcmp.eq.s32.totalorder %v180, %v21
  %vm213 = vcmp.eq.s32.totalorder %v180, %v22
  %vm214 = vcmp.eq.s32.totalorder %v183, %v21
  %vm215 = vcmp.eq.s32.totalorder %v183, %v22
  %vm216 = vmor %vm87, %vm184
  %vm217 = vmor %vm88, %vm185
  %vm218 = vmor %vm89, %vm186
  %vm219 = vmor %vm90, %vm187
  %vm220 = vmor %vm91, %vm188
  %vm221 = vmor %vm92, %vm189
  %vm222 = vmor %vm93, %vm190
  %vm223 = vmor %vm94, %vm191
  %vm224 = vmor %vm95, %vm192
  %vm225 = vmor %vm96, %vm193
  %vm226 = vmor %vm97, %vm194
  %vm227 = vmor %vm98, %vm195
  %vm228 = vmor %vm99, %vm196
  %vm229 = vmor %vm100, %vm197
  %vm230 = vmor %vm101, %vm198
  %vm231 = vmor %vm102, %vm199
  %vm232 = vmor %vm103, %vm200
  %vm233 = vmor %vm104, %vm201
  %vm234 = vmor %vm105, %vm202
  %vm235 = vmor %vm106, %vm203
  %vm236 = vmor %vm107, %vm204
  %vm237 = vmor %vm108, %vm205
  %vm238 = vmor %vm109, %vm206
  %vm239 = vmor %vm110, %vm207
  %vm240 = vmor %vm111, %vm208
  %vm241 = vmor %vm112, %vm209
  %vm242 = vmor %vm113, %vm210
  %vm243 = vmor %vm114, %vm211
  %vm244 = vmor %vm115, %vm212
  %vm245 = vmor %vm116, %vm213
  %vm246 = vmor %vm117, %vm214
  %vm247 = vmor %vm118, %vm215
  %s248 = scalar_lea.vmem %s0, 256
  %v249 = vld [vmem:[%s248] sm:$0xff]
  %v250 = vld [vmem:[%s248 + $0x8] sm:$0xff]
  %v251 = vld [vmem:[%s248 + $0x10] sm:$0xff]
  %v252 = vld [vmem:[%s248 + $0x18] sm:$0xff]
  %v253 = vld [vmem:[%s248 + $0x20] sm:$0xff]
  %v254 = vld [vmem:[%s248 + $0x28] sm:$0xff]
  %v255 = vld [vmem:[%s248 + $0x30] sm:$0xff]
  %v256 = vld [vmem:[%s248 + $0x38] sm:$0xff]
  %v257 = vld [vmem:[%s248 + $0x40] sm:$0xff]
  %v258 = vld [vmem:[%s248 + $0x48] sm:$0xff]
  %v259 = vld [vmem:[%s248 + $0x50] sm:$0xff]
  %v260 = vld [vmem:[%s248 + $0x58] sm:$0xff]
  %v261 = vld [vmem:[%s248 + $0x60] sm:$0xff]
  %v262 = vld [vmem:[%s248 + $0x68] sm:$0xff]
  %v263 = vld [vmem:[%s248 + $0x70] sm:$0xff]
  %v264 = vld [vmem:[%s248 + $0x78] sm:$0xff]
  %265 = vset.pattern.permute.xlu0 0
  %266 = vperm.xlu0 %265, %v249
  %v267 = vpop.permute.xlu0 %266
  %268 = vset.pattern.permute.xlu0 0
  %269 = vperm.xlu0 %268, %v250
  %v270 = vpop.permute.xlu0 %269
  %271 = vset.pattern.permute.xlu0 0
  %272 = vperm.xlu0 %271, %v251
  %v273 = vpop.permute.xlu0 %272
  %274 = vset.pattern.permute.xlu0 0
  %275 = vperm.xlu0 %274, %v252
  %v276 = vpop.permute.xlu0 %275
  %277 = vset.pattern.permute.xlu0 0
  %278 = vperm.xlu0 %277, %v253
  %v279 = vpop.permute.xlu0 %278
  %280 = vset.pattern.permute.xlu0 0
  %281 = vperm.xlu0 %280, %v254
  %v282 = vpop.permute.xlu0 %281
  %283 = vset.pattern.permute.xlu0 0
  %284 = vperm.xlu0 %283, %v255
  %v285 = vpop.permute.xlu0 %284
  %286 = vset.pattern.permute.xlu0 0
  %287 = vperm.xlu0 %286, %v256
  %v288 = vpop.permute.xlu0 %287
  %289 = vset.pattern.permute.xlu0 0
  %290 = vperm.xlu0 %289, %v257
  %v291 = vpop.permute.xlu0 %290
  %292 = vset.pattern.permute.xlu0 0
  %293 = vperm.xlu0 %292, %v258
  %v294 = vpop.permute.xlu0 %293
  %295 = vset.pattern.permute.xlu0 0
  %296 = vperm.xlu0 %295, %v259
  %v297 = vpop.permute.xlu0 %296
  %298 = vset.pattern.permute.xlu0 0
  %299 = vperm.xlu0 %298, %v260
  %v300 = vpop.permute.xlu0 %299
  %301 = vset.pattern.permute.xlu0 0
  %302 = vperm.xlu0 %301, %v261
  %v303 = vpop.permute.xlu0 %302
  %304 = vset.pattern.permute.xlu0 0
  %305 = vperm.xlu0 %304, %v262
  %v306 = vpop.permute.xlu0 %305
  %307 = vset.pattern.permute.xlu0 0
  %308 = vperm.xlu0 %307, %v263
  %v309 = vpop.permute.xlu0 %308
  %310 = vset.pattern.permute.xlu0 0
  %311 = vperm.xlu0 %310, %v264
  %v312 = vpop.permute.xlu0 %311
  %vm313 = vcmp.eq.s32.totalorder %v267, %v21
  %vm314 = vcmp.eq.s32.totalorder %v267, %v22
  %vm315 = vcmp.eq.s32.totalorder %v270, %v21
  %vm316 = vcmp.eq.s32.totalorder %v270, %v22
  %vm317 = vcmp.eq.s32.totalorder %v273, %v21
  %vm318 = vcmp.eq.s32.totalorder %v273, %v22
  %vm319 = vcmp.eq.s32.totalorder %v276, %v21
  %vm320 = vcmp.eq.s32.totalorder %v276, %v22
  %vm321 = vcmp.eq.s32.totalorder %v279, %v21
  %vm322 = vcmp.eq.s32.totalorder %v279, %v22
  %vm323 = vcmp.eq.s32.totalorder %v282, %v21
  %vm324 = vcmp.eq.s32.totalorder %v282, %v22
  %vm325 = vcmp.eq.s32.totalorder %v285, %v21
  %vm326 = vcmp.eq.s32.totalorder %v285, %v22
  %vm327 = vcmp.eq.s32.totalorder %v288, %v21
  %vm328 = vcmp.eq.s32.totalorder %v288, %v22
  %vm329 = vcmp.eq.s32.totalorder %v291, %v21
  %vm330 = vcmp.eq.s32.totalorder %v291, %v22
  %vm331 = vcmp.eq.s32.totalorder %v294, %v21
  %vm332 = vcmp.eq.s32.totalorder %v294, %v22
  %vm333 = vcmp.eq.s32.totalorder %v297, %v21
  %vm334 = vcmp.eq.s32.totalorder %v297, %v22
  %vm335 = vcmp.eq.s32.totalorder %v300, %v21
  %vm336 = vcmp.eq.s32.totalorder %v300, %v22
  %vm337 = vcmp.eq.s32.totalorder %v303, %v21
  %vm338 = vcmp.eq.s32.totalorder %v303, %v22
  %vm339 = vcmp.eq.s32.totalorder %v306, %v21
  %vm340 = vcmp.eq.s32.totalorder %v306, %v22
  %vm341 = vcmp.eq.s32.totalorder %v309, %v21
  %vm342 = vcmp.eq.s32.totalorder %v309, %v22
  %vm343 = vcmp.eq.s32.totalorder %v312, %v21
  %vm344 = vcmp.eq.s32.totalorder %v312, %v22
  %vm345 = vmor %vm216, %vm313
  %vm346 = vmor %vm217, %vm314
  %vm347 = vmor %vm218, %vm315
  %vm348 = vmor %vm219, %vm316
  %vm349 = vmor %vm220, %vm317
  %vm350 = vmor %vm221, %vm318
  %vm351 = vmor %vm222, %vm319
  %vm352 = vmor %vm223, %vm320
  %vm353 = vmor %vm224, %vm321
  %vm354 = vmor %vm225, %vm322
  %vm355 = vmor %vm226, %vm323
  %vm356 = vmor %vm227, %vm324
  %vm357 = vmor %vm228, %vm325
  %vm358 = vmor %vm229, %vm326
  %vm359 = vmor %vm230, %vm327
  %vm360 = vmor %vm231, %vm328
  %vm361 = vmor %vm232, %vm329
  %vm362 = vmor %vm233, %vm330
  %vm363 = vmor %vm234, %vm331
  %vm364 = vmor %vm235, %vm332
  %vm365 = vmor %vm236, %vm333
  %vm366 = vmor %vm237, %vm334
  %vm367 = vmor %vm238, %vm335
  %vm368 = vmor %vm239, %vm336
  %vm369 = vmor %vm240, %vm337
  %vm370 = vmor %vm241, %vm338
  %vm371 = vmor %vm242, %vm339
  %vm372 = vmor %vm243, %vm340
  %vm373 = vmor %vm244, %vm341
  %vm374 = vmor %vm245, %vm342
  %vm375 = vmor %vm246, %vm343
  %vm376 = vmor %vm247, %vm344
  %s377 = scalar_lea.vmem %s0, 384
  %v378 = vld [vmem:[%s377] sm:$0xff]
  %v379 = vld [vmem:[%s377 + $0x8] sm:$0xff]
  %v380 = vld [vmem:[%s377 + $0x10] sm:$0xff]
  %v381 = vld [vmem:[%s377 + $0x18] sm:$0xff]
  %v382 = vld [vmem:[%s377 + $0x20] sm:$0xff]
  %v383 = vld [vmem:[%s377 + $0x28] sm:$0xff]
  %v384 = vld [vmem:[%s377 + $0x30] sm:$0xff]
  %v385 = vld [vmem:[%s377 + $0x38] sm:$0xff]
  %v386 = vld [vmem:[%s377 + $0x40] sm:$0xff]
  %v387 = vld [vmem:[%s377 + $0x48] sm:$0xff]
  %v388 = vld [vmem:[%s377 + $0x50] sm:$0xff]
  %v389 = vld [vmem:[%s377 + $0x58] sm:$0xff]
  %v390 = vld [vmem:[%s377 + $0x60] sm:$0xff]
  %v391 = vld [vmem:[%s377 + $0x68] sm:$0xff]
  %v392 = vld [vmem:[%s377 + $0x70] sm:$0xff]
  %v393 = vld [vmem:[%s377 + $0x78] sm:$0xff]
  %394 = vset.pattern.permute.xlu0 0
  %395 = vperm.xlu0 %394, %v378
  %v396 = vpop.permute.xlu0 %395
  %397 = vset.pattern.permute.xlu0 0
  %398 = vperm.xlu0 %397, %v379
  %v399 = vpop.permute.xlu0 %398
  %400 = vset.pattern.permute.xlu0 0
  %401 = vperm.xlu0 %400, %v380
  %v402 = vpop.permute.xlu0 %401
  %403 = vset.pattern.permute.xlu0 0
  %404 = vperm.xlu0 %403, %v381
  %v405 = vpop.permute.xlu0 %404
  %406 = vset.pattern.permute.xlu0 0
  %407 = vperm.xlu0 %406, %v382
  %v408 = vpop.permute.xlu0 %407
  %409 = vset.pattern.permute.xlu0 0
  %410 = vperm.xlu0 %409, %v383
  %v411 = vpop.permute.xlu0 %410
  %412 = vset.pattern.permute.xlu0 0
  %413 = vperm.xlu0 %412, %v384
  %v414 = vpop.permute.xlu0 %413
  %415 = vset.pattern.permute.xlu0 0
  %416 = vperm.xlu0 %415, %v385
  %v417 = vpop.permute.xlu0 %416
  %418 = vset.pattern.permute.xlu0 0
  %419 = vperm.xlu0 %418, %v386
  %v420 = vpop.permute.xlu0 %419
  %421 = vset.pattern.permute.xlu0 0
  %422 = vperm.xlu0 %421, %v387
  %v423 = vpop.permute.xlu0 %422
  %424 = vset.pattern.permute.xlu0 0
  %425 = vperm.xlu0 %424, %v388
  %v426 = vpop.permute.xlu0 %425
  %427 = vset.pattern.permute.xlu0 0
  %428 = vperm.xlu0 %427, %v389
  %v429 = vpop.permute.xlu0 %428
  %430 = vset.pattern.permute.xlu0 0
  %431 = vperm.xlu0 %430, %v390
  %v432 = vpop.permute.xlu0 %431
  %433 = vset.pattern.permute.xlu0 0
  %434 = vperm.xlu0 %433, %v391
  %v435 = vpop.permute.xlu0 %434
  %436 = vset.pattern.permute.xlu0 0
  %437 = vperm.xlu0 %436, %v392
  %v438 = vpop.permute.xlu0 %437
  %439 = vset.pattern.permute.xlu0 0
  %440 = vperm.xlu0 %439, %v393
  %v441 = vpop.permute.xlu0 %440
  %vm442 = vcmp.eq.s32.totalorder %v396, %v21
  %vm443 = vcmp.eq.s32.totalorder %v396, %v22
  %vm444 = vcmp.eq.s32.totalorder %v399, %v21
  %vm445 = vcmp.eq.s32.totalorder %v399, %v22
  %vm446 = vcmp.eq.s32.totalorder %v402, %v21
  %vm447 = vcmp.eq.s32.totalorder %v402, %v22
  %vm448 = vcmp.eq.s32.totalorder %v405, %v21
  %vm449 = vcmp.eq.s32.totalorder %v405, %v22
  %vm450 = vcmp.eq.s32.totalorder %v408, %v21
  %vm451 = vcmp.eq.s32.totalorder %v408, %v22
  %vm452 = vcmp.eq.s32.totalorder %v411, %v21
  %vm453 = vcmp.eq.s32.totalorder %v411, %v22
  %vm454 = vcmp.eq.s32.totalorder %v414, %v21
  %vm455 = vcmp.eq.s32.totalorder %v414, %v22
  %vm456 = vcmp.eq.s32.totalorder %v417, %v21
  %vm457 = vcmp.eq.s32.totalorder %v417, %v22
  %vm458 = vcmp.eq.s32.totalorder %v420, %v21
  %vm459 = vcmp.eq.s32.totalorder %v420, %v22
  %vm460 = vcmp.eq.s32.totalorder %v423, %v21
  %vm461 = vcmp.eq.s32.totalorder %v423, %v22
  %vm462 = vcmp.eq.s32.totalorder %v426, %v21
  %vm463 = vcmp.eq.s32.totalorder %v426, %v22
  %vm464 = vcmp.eq.s32.totalorder %v429, %v21
  %vm465 = vcmp.eq.s32.totalorder %v429, %v22
  %vm466 = vcmp.eq.s32.totalorder %v432, %v21
  %vm467 = vcmp.eq.s32.totalorder %v432, %v22
  %vm468 = vcmp.eq.s32.totalorder %v435, %v21
  %vm469 = vcmp.eq.s32.totalorder %v435, %v22
  %vm470 = vcmp.eq.s32.totalorder %v438, %v21
  %vm471 = vcmp.eq.s32.totalorder %v438, %v22
  %vm472 = vcmp.eq.s32.totalorder %v441, %v21
  %vm473 = vcmp.eq.s32.totalorder %v441, %v22
  %vm474 = vmor %vm345, %vm442
  %vm475 = vmor %vm346, %vm443
  %vm476 = vmor %vm347, %vm444
  %vm477 = vmor %vm348, %vm445
  %vm478 = vmor %vm349, %vm446
  %vm479 = vmor %vm350, %vm447
  %vm480 = vmor %vm351, %vm448
  %vm481 = vmor %vm352, %vm449
  %vm482 = vmor %vm353, %vm450
  %vm483 = vmor %vm354, %vm451
  %vm484 = vmor %vm355, %vm452
  %vm485 = vmor %vm356, %vm453
  %vm486 = vmor %vm357, %vm454
  %vm487 = vmor %vm358, %vm455
  %vm488 = vmor %vm359, %vm456
  %vm489 = vmor %vm360, %vm457
  %vm490 = vmor %vm361, %vm458
  %vm491 = vmor %vm362, %vm459
  %vm492 = vmor %vm363, %vm460
  %vm493 = vmor %vm364, %vm461
  %vm494 = vmor %vm365, %vm462
  %vm495 = vmor %vm366, %vm463
  %vm496 = vmor %vm367, %vm464
  %vm497 = vmor %vm368, %vm465
  %vm498 = vmor %vm369, %vm466
  %vm499 = vmor %vm370, %vm467
  %vm500 = vmor %vm371, %vm468
  %vm501 = vmor %vm372, %vm469
  %vm502 = vmor %vm373, %vm470
  %vm503 = vmor %vm374, %vm471
  %vm504 = vmor %vm375, %vm472
  %vm505 = vmor %vm376, %vm473
  %s506 = scalar_lea.vmem %s0, 512
  %v507 = vld [vmem:[%s506] sm:$0xff]
  %v508 = vld [vmem:[%s506 + $0x8] sm:$0xff]
  %v509 = vld [vmem:[%s506 + $0x10] sm:$0xff]
  %v510 = vld [vmem:[%s506 + $0x18] sm:$0xff]
  %v511 = vld [vmem:[%s506 + $0x20] sm:$0xff]
  %v512 = vld [vmem:[%s506 + $0x28] sm:$0xff]
  %v513 = vld [vmem:[%s506 + $0x30] sm:$0xff]
  %v514 = vld [vmem:[%s506 + $0x38] sm:$0xff]
  %v515 = vld [vmem:[%s506 + $0x40] sm:$0xff]
  %v516 = vld [vmem:[%s506 + $0x48] sm:$0xff]
  %v517 = vld [vmem:[%s506 + $0x50] sm:$0xff]
  %v518 = vld [vmem:[%s506 + $0x58] sm:$0xff]
  %v519 = vld [vmem:[%s506 + $0x60] sm:$0xff]
  %v520 = vld [vmem:[%s506 + $0x68] sm:$0xff]
  %v521 = vld [vmem:[%s506 + $0x70] sm:$0xff]
  %v522 = vld [vmem:[%s506 + $0x78] sm:$0xff]
  %523 = vset.pattern.permute.xlu0 0
  %524 = vperm.xlu0 %523, %v507
  %v525 = vpop.permute.xlu0 %524
  %526 = vset.pattern.permute.xlu0 0
  %527 = vperm.xlu0 %526, %v508
  %v528 = vpop.permute.xlu0 %527
  %529 = vset.pattern.permute.xlu0 0
  %530 = vperm.xlu0 %529, %v509
  %v531 = vpop.permute.xlu0 %530
  %532 = vset.pattern.permute.xlu0 0
  %533 = vperm.xlu0 %532, %v510
  %v534 = vpop.permute.xlu0 %533
  %535 = vset.pattern.permute.xlu0 0
  %536 = vperm.xlu0 %535, %v511
  %v537 = vpop.permute.xlu0 %536
  %538 = vset.pattern.permute.xlu0 0
  %539 = vperm.xlu0 %538, %v512
  %v540 = vpop.permute.xlu0 %539
  %541 = vset.pattern.permute.xlu0 0
  %542 = vperm.xlu0 %541, %v513
  %v543 = vpop.permute.xlu0 %542
  %544 = vset.pattern.permute.xlu0 0
  %545 = vperm.xlu0 %544, %v514
  %v546 = vpop.permute.xlu0 %545
  %547 = vset.pattern.permute.xlu0 0
  %548 = vperm.xlu0 %547, %v515
  %v549 = vpop.permute.xlu0 %548
  %550 = vset.pattern.permute.xlu0 0
  %551 = vperm.xlu0 %550, %v516
  %v552 = vpop.permute.xlu0 %551
  %553 = vset.pattern.permute.xlu0 0
  %554 = vperm.xlu0 %553, %v517
  %v555 = vpop.permute.xlu0 %554
  %556 = vset.pattern.permute.xlu0 0
  %557 = vperm.xlu0 %556, %v518
  %v558 = vpop.permute.xlu0 %557
  %559 = vset.pattern.permute.xlu0 0
  %560 = vperm.xlu0 %559, %v519
  %v561 = vpop.permute.xlu0 %560
  %562 = vset.pattern.permute.xlu0 0
  %563 = vperm.xlu0 %562, %v520
  %v564 = vpop.permute.xlu0 %563
  %565 = vset.pattern.permute.xlu0 0
  %566 = vperm.xlu0 %565, %v521
  %v567 = vpop.permute.xlu0 %566
  %568 = vset.pattern.permute.xlu0 0
  %569 = vperm.xlu0 %568, %v522
  %v570 = vpop.permute.xlu0 %569
  %vm571 = vcmp.eq.s32.totalorder %v525, %v21
  %vm572 = vcmp.eq.s32.totalorder %v525, %v22
  %vm573 = vcmp.eq.s32.totalorder %v528, %v21
  %vm574 = vcmp.eq.s32.totalorder %v528, %v22
  %vm575 = vcmp.eq.s32.totalorder %v531, %v21
  %vm576 = vcmp.eq.s32.totalorder %v531, %v22
  %vm577 = vcmp.eq.s32.totalorder %v534, %v21
  %vm578 = vcmp.eq.s32.totalorder %v534, %v22
  %vm579 = vcmp.eq.s32.totalorder %v537, %v21
  %vm580 = vcmp.eq.s32.totalorder %v537, %v22
  %vm581 = vcmp.eq.s32.totalorder %v540, %v21
  %vm582 = vcmp.eq.s32.totalorder %v540, %v22
  %vm583 = vcmp.eq.s32.totalorder %v543, %v21
  %vm584 = vcmp.eq.s32.totalorder %v543, %v22
  %vm585 = vcmp.eq.s32.totalorder %v546, %v21
  %vm586 = vcmp.eq.s32.totalorder %v546, %v22
  %vm587 = vcmp.eq.s32.totalorder %v549, %v21
  %vm588 = vcmp.eq.s32.totalorder %v549, %v22
  %vm589 = vcmp.eq.s32.totalorder %v552, %v21
  %vm590 = vcmp.eq.s32.totalorder %v552, %v22
  %vm591 = vcmp.eq.s32.totalorder %v555, %v21
  %vm592 = vcmp.eq.s32.totalorder %v555, %v22
  %vm593 = vcmp.eq.s32.totalorder %v558, %v21
  %vm594 = vcmp.eq.s32.totalorder %v558, %v22
  %vm595 = vcmp.eq.s32.totalorder %v561, %v21
  %vm596 = vcmp.eq.s32.totalorder %v561, %v22
  %vm597 = vcmp.eq.s32.totalorder %v564, %v21
  %vm598 = vcmp.eq.s32.totalorder %v564, %v22
  %vm599 = vcmp.eq.s32.totalorder %v567, %v21
  %vm600 = vcmp.eq.s32.totalorder %v567, %v22
  %vm601 = vcmp.eq.s32.totalorder %v570, %v21
  %vm602 = vcmp.eq.s32.totalorder %v570, %v22
  %vm603 = vmor %vm474, %vm571
  %vm604 = vmor %vm475, %vm572
  %vm605 = vmor %vm476, %vm573
  %vm606 = vmor %vm477, %vm574
  %vm607 = vmor %vm478, %vm575
  %vm608 = vmor %vm479, %vm576
  %vm609 = vmor %vm480, %vm577
  %vm610 = vmor %vm481, %vm578
  %vm611 = vmor %vm482, %vm579
  %vm612 = vmor %vm483, %vm580
  %vm613 = vmor %vm484, %vm581
  %vm614 = vmor %vm485, %vm582
  %vm615 = vmor %vm486, %vm583
  %vm616 = vmor %vm487, %vm584
  %vm617 = vmor %vm488, %vm585
  %vm618 = vmor %vm489, %vm586
  %vm619 = vmor %vm490, %vm587
  %vm620 = vmor %vm491, %vm588
  %vm621 = vmor %vm492, %vm589
  %vm622 = vmor %vm493, %vm590
  %vm623 = vmor %vm494, %vm591
  %vm624 = vmor %vm495, %vm592
  %vm625 = vmor %vm496, %vm593
  %vm626 = vmor %vm497, %vm594
  %vm627 = vmor %vm498, %vm595
  %vm628 = vmor %vm499, %vm596
  %vm629 = vmor %vm500, %vm597
  %vm630 = vmor %vm501, %vm598
  %vm631 = vmor %vm502, %vm599
  %vm632 = vmor %vm503, %vm600
  %vm633 = vmor %vm504, %vm601
  %vm634 = vmor %vm505, %vm602
  %v635 = vsel %vm603, 1, 0
  %v636 = vsel %vm604, 1, 0
  %v637 = vsel %vm605, 1, 0
  %v638 = vsel %vm606, 1, 0
  %v639 = vsel %vm607, 1, 0
  %v640 = vsel %vm608, 1, 0
  %v641 = vsel %vm609, 1, 0
  %v642 = vsel %vm610, 1, 0
  %v643 = vsel %vm611, 1, 0
  %v644 = vsel %vm612, 1, 0
  %v645 = vsel %vm613, 1, 0
  %v646 = vsel %vm614, 1, 0
  %v647 = vsel %vm615, 1, 0
  %v648 = vsel %vm616, 1, 0
  %v649 = vsel %vm617, 1, 0
  %v650 = vsel %vm618, 1, 0
  %v651 = vsel %vm619, 1, 0
  %v652 = vsel %vm620, 1, 0
  %v653 = vsel %vm621, 1, 0
  %v654 = vsel %vm622, 1, 0
  %v655 = vsel %vm623, 1, 0
  %v656 = vsel %vm624, 1, 0
  %v657 = vsel %vm625, 1, 0
  %v658 = vsel %vm626, 1, 0
  %v659 = vsel %vm627, 1, 0
  %v660 = vsel %vm628, 1, 0
  %v661 = vsel %vm629, 1, 0
  %v662 = vsel %vm630, 1, 0
  %v663 = vsel %vm631, 1, 0
  %v664 = vsel %vm632, 1, 0
  %v665 = vsel %vm633, 1, 0
  %v666 = vsel %vm634, 1, 0
  %v667 = vcvt.s32.f32 %v635
  %v668 = vcvt.s32.f32 %v636
  %v669 = vcvt.s32.f32 %v637
  %v670 = vcvt.s32.f32 %v638
  %v671 = vcvt.s32.f32 %v639
  %v672 = vcvt.s32.f32 %v640
  %v673 = vcvt.s32.f32 %v641
  %v674 = vcvt.s32.f32 %v642
  %v675 = vcvt.s32.f32 %v643
  %v676 = vcvt.s32.f32 %v644
  %v677 = vcvt.s32.f32 %v645
  %v678 = vcvt.s32.f32 %v646
  %v679 = vcvt.s32.f32 %v647
  %v680 = vcvt.s32.f32 %v648
  %v681 = vcvt.s32.f32 %v649
  %v682 = vcvt.s32.f32 %v650
  %v683 = vcvt.s32.f32 %v651
  %v684 = vcvt.s32.f32 %v652
  %v685 = vcvt.s32.f32 %v653
  %v686 = vcvt.s32.f32 %v654
  %v687 = vcvt.s32.f32 %v655
  %v688 = vcvt.s32.f32 %v656
  %v689 = vcvt.s32.f32 %v657
  %v690 = vcvt.s32.f32 %v658
  %v691 = vcvt.s32.f32 %v659
  %v692 = vcvt.s32.f32 %v660
  %v693 = vcvt.s32.f32 %v661
  %v694 = vcvt.s32.f32 %v662
  %v695 = vcvt.s32.f32 %v663
  %v696 = vcvt.s32.f32 %v664
  %v697 = vcvt.s32.f32 %v665
  %v698 = vcvt.s32.f32 %v666
  %v699 = vld [vmem:[%s1] sm:$0xff]
  %v700 = vld [vmem:[%s1 + $0x8] sm:$0xff]
  %v701 = vld [vmem:[%s1 + $0x10] sm:$0xff]
  %v702 = vld [vmem:[%s1 + $0x18] sm:$0xff]
  %v703 = vld [vmem:[%s1 + $0x20] sm:$0xff]
  %v704 = vld [vmem:[%s1 + $0x28] sm:$0xff]
  %v705 = vld [vmem:[%s1 + $0x30] sm:$0xff]
  %v706 = vld [vmem:[%s1 + $0x38] sm:$0xff]
  %v707 = vld [vmem:[%s1 + $0x40] sm:$0xff]
  %v708 = vld [vmem:[%s1 + $0x48] sm:$0xff]
  %v709 = vld [vmem:[%s1 + $0x50] sm:$0xff]
  %v710 = vld [vmem:[%s1 + $0x58] sm:$0xff]
  %v711 = vld [vmem:[%s1 + $0x60] sm:$0xff]
  %v712 = vld [vmem:[%s1 + $0x68] sm:$0xff]
  %v713 = vld [vmem:[%s1 + $0x70] sm:$0xff]
  %v714 = vld [vmem:[%s1 + $0x78] sm:$0xff]
  %v715 = vld [vmem:[%s1 + $0x80] sm:$0xff]
  %v716 = vld [vmem:[%s1 + $0x88] sm:$0xff]
  %v717 = vld [vmem:[%s1 + $0x90] sm:$0xff]
  %v718 = vld [vmem:[%s1 + $0x98] sm:$0xff]
  %v719 = vld [vmem:[%s1 + $0xa0] sm:$0xff]
  %v720 = vld [vmem:[%s1 + $0xa8] sm:$0xff]
  %v721 = vld [vmem:[%s1 + $0xb0] sm:$0xff]
  %v722 = vld [vmem:[%s1 + $0xb8] sm:$0xff]
  %v723 = vld [vmem:[%s1 + $0xc0] sm:$0xff]
  %v724 = vld [vmem:[%s1 + $0xc8] sm:$0xff]
  %v725 = vld [vmem:[%s1 + $0xd0] sm:$0xff]
  %v726 = vld [vmem:[%s1 + $0xd8] sm:$0xff]
  %v727 = vld [vmem:[%s1 + $0xe0] sm:$0xff]
  %v728 = vld [vmem:[%s1 + $0xe8] sm:$0xff]
  %v729 = vld [vmem:[%s1 + $0xf0] sm:$0xff]
  %v730 = vld [vmem:[%s1 + $0xf8] sm:$0xff]
  %v731 = vld [vmem:[%s2] sm:$0x1]
  %v732 = vlaneseq
  %v733 = vshrl.u32 %v732, 7
  %v734 = vsub.s32 0, %v733
  %v735 = vrot.slane %v731, %v734
  %736 = vmatprep.subr.mxu0 0.0
  %737 = vmatpush1.msra.mxu0 %v699
  %738 = vmatprep.subr.mxu0 0.0
  %739 = vmatpush1.msra.mxu0 %v700
  %740 = vmatprep.subr.mxu0 0.0
  %741 = vmatpush1.msra.mxu0 %v701
  %742 = vmatprep.subr.mxu0 0.0
  %743 = vmatpush1.msra.mxu0 %v702
  %744 = vmatprep.subr.mxu0 0.0
  %745 = vmatpush1.msra.mxu0 %v703
  %746 = vmatprep.subr.mxu0 0.0
  %747 = vmatpush1.msra.mxu0 %v704
  %748 = vmatprep.subr.mxu0 0.0
  %749 = vmatpush1.msra.mxu0 %v705
  %750 = vmatprep.subr.mxu0 0.0
  %751 = vmatpush1.msra.mxu0 %v706
  %752 = vmatprep.subr.mxu0 0.0
  %753 = vmatpush1.msra.mxu0 %v707
  %754 = vmatprep.subr.mxu0 0.0
  %755 = vmatpush1.msra.mxu0 %v708
  %756 = vmatprep.subr.mxu0 0.0
  %757 = vmatpush1.msra.mxu0 %v709
  %758 = vmatprep.subr.mxu0 0.0
  %759 = vmatpush1.msra.mxu0 %v710
  %760 = vmatprep.subr.mxu0 0.0
  %761 = vmatpush1.msra.mxu0 %v711
  %762 = vmatprep.subr.mxu0 0.0
  %763 = vmatpush1.msra.mxu0 %v712
  %764 = vmatprep.subr.mxu0 0.0
  %765 = vmatpush1.msra.mxu0 %v713
  %766 = vmatprep.subr.mxu0 0.0
  %767 = vmatpush1.msra.mxu0 %v714
  %768 = vmatprep.subr.mxu0 0.0
  %769 = vmatpush1.msra.mxu0 %v715
  %770 = vmatprep.subr.mxu0 0.0
  %771 = vmatpush1.msra.mxu0 %v716
  %772 = vmatprep.subr.mxu0 0.0
  %773 = vmatpush1.msra.mxu0 %v717
  %774 = vmatprep.subr.mxu0 0.0
  %775 = vmatpush1.msra.mxu0 %v718
  %776 = vmatprep.subr.mxu0 0.0
  %777 = vmatpush1.msra.mxu0 %v719
  %778 = vmatprep.subr.mxu0 0.0
  %779 = vmatpush1.msra.mxu0 %v720
  %780 = vmatprep.subr.mxu0 0.0
  %781 = vmatpush1.msra.mxu0 %v721
  %782 = vmatprep.subr.mxu0 0.0
  %783 = vmatpush1.msra.mxu0 %v722
  %784 = vmatprep.subr.mxu0 0.0
  %785 = vmatpush1.msra.mxu0 %v723
  %786 = vmatprep.subr.mxu0 0.0
  %787 = vmatpush1.msra.mxu0 %v724
  %788 = vmatprep.subr.mxu0 0.0
  %789 = vmatpush1.msra.mxu0 %v725
  %790 = vmatprep.subr.mxu0 0.0
  %791 = vmatpush1.msra.mxu0 %v726
  %792 = vmatprep.subr.mxu0 0.0
  %793 = vmatpush1.msra.mxu0 %v727
  %794 = vmatprep.subr.mxu0 0.0
  %795 = vmatpush1.msra.mxu0 %v728
  %796 = vmatprep.subr.mxu0 0.0
  %797 = vmatpush1.msra.mxu0 %v729
  %798 = vmatprep.subr.mxu0 0.0
  %799 = vmatpush1.msra.mxu0 %v730
  %800 = vmatprep.mubr.f32.mxu0 %v668
  %801 = vmatmul.mubr.f32.gmra.mrb[0].mxu0 %v667
  %v802 = vpop.f32.mrb[0].mxu0
  %v803 = vadd.f32 %v735, %v802
  %v804 = vpop.f32.mrb[0].mxu0
  %805 = vmatprep.mubr.f32.mxu0 %v670
  %806 = vmatmul.mubr.f32.gmra.mrb[0].mxu0 %v669
  %v807 = vpop.f32.mrb[0].mxu0
  %v808 = vadd.f32 %v735, %v807
  %v809 = vpop.f32.mrb[0].mxu0
  %810 = vmatprep.mubr.f32.mxu0 %v672
  %811 = vmatmul.mubr.f32.gmra.mrb[0].mxu0 %v671
  %v812 = vpop.f32.mrb[0].mxu0
  %v813 = vadd.f32 %v735, %v812
  %v814 = vpop.f32.mrb[0].mxu0
  %815 = vmatprep.mubr.f32.mxu0 %v674
  %816 = vmatmul.mubr.f32.gmra.mrb[0].mxu0 %v673
  %v817 = vpop.f32.mrb[0].mxu0
  %v818 = vadd.f32 %v735, %v817
  %v819 = vpop.f32.mrb[0].mxu0
  %820 = vmatprep.mubr.f32.mxu0 %v676
  %821 = vmatmul.mubr.f32.gmra.mrb[0].mxu0 %v675
  %v822 = vpop.f32.mrb[0].mxu0
  %v823 = vadd.f32 %v735, %v822
  %v824 = vpop.f32.mrb[0].mxu0
  %825 = vmatprep.mubr.f32.mxu0 %v678
  %826 = vmatmul.mubr.f32.gmra.mrb[0].mxu0 %v677
  %v827 = vpop.f32.mrb[0].mxu0
  %v828 = vadd.f32 %v735, %v827
  %v829 = vpop.f32.mrb[0].mxu0
  %830 = vmatprep.mubr.f32.mxu0 %v680
  %831 = vmatmul.mubr.f32.gmra.mrb[0].mxu0 %v679
  %v832 = vpop.f32.mrb[0].mxu0
  %v833 = vadd.f32 %v735, %v832
  %v834 = vpop.f32.mrb[0].mxu0
  %835 = vmatprep.mubr.f32.mxu0 %v682
  %836 = vmatmul.mubr.f32.gmra.mrb[0].mxu0 %v681
  %v837 = vpop.f32.mrb[0].mxu0
  %v838 = vadd.f32 %v735, %v837
  %v839 = vpop.f32.mrb[0].mxu0
  %840 = vmatprep.mubr.f32.mxu0 %v684
  %841 = vmatmul.mubr.f32.gmra.mrb[0].mxu0 %v683
  %v842 = vpop.f32.mrb[0].mxu0
  %v843 = vadd.f32 %v735, %v842
  %v844 = vpop.f32.mrb[0].mxu0
  %845 = vmatprep.mubr.f32.mxu0 %v686
  %846 = vmatmul.mubr.f32.gmra.mrb[0].mxu0 %v685
  %v847 = vpop.f32.mrb[0].mxu0
  %v848 = vadd.f32 %v735, %v847
  %v849 = vpop.f32.mrb[0].mxu0
  %850 = vmatprep.mubr.f32.mxu0 %v688
  %851 = vmatmul.mubr.f32.gmra.mrb[0].mxu0 %v687
  %v852 = vpop.f32.mrb[0].mxu0
  %v853 = vadd.f32 %v735, %v852
  %v854 = vpop.f32.mrb[0].mxu0
  %855 = vmatprep.mubr.f32.mxu0 %v690
  %856 = vmatmul.mubr.f32.gmra.mrb[0].mxu0 %v689
  %v857 = vpop.f32.mrb[0].mxu0
  %v858 = vadd.f32 %v735, %v857
  %v859 = vpop.f32.mrb[0].mxu0
  %860 = vmatprep.mubr.f32.mxu0 %v692
  %861 = vmatmul.mubr.f32.gmra.mrb[0].mxu0 %v691
  %v862 = vpop.f32.mrb[0].mxu0
  %v863 = vadd.f32 %v735, %v862
  %v864 = vpop.f32.mrb[0].mxu0
  %865 = vmatprep.mubr.f32.mxu0 %v694
  %866 = vmatmul.mubr.f32.gmra.mrb[0].mxu0 %v693
  %v867 = vpop.f32.mrb[0].mxu0
  %v868 = vadd.f32 %v735, %v867
  %v869 = vpop.f32.mrb[0].mxu0
  %870 = vmatprep.mubr.f32.mxu0 %v696
  %871 = vmatmul.mubr.f32.gmra.mrb[0].mxu0 %v695
  %v872 = vpop.f32.mrb[0].mxu0
  %v873 = vadd.f32 %v735, %v872
  %v874 = vpop.f32.mrb[0].mxu0
  %875 = vmatprep.mubr.f32.mxu0 %v698
  %876 = vmatmul.mubr.f32.gmra.mrb[0].mxu0 %v697
  %v877 = vpop.f32.mrb[0].mxu0
  %v878 = vadd.f32 %v735, %v877
  %v879 = vpop.f32.mrb[0].mxu0
  %880 = vdwg.mxu0
  %v881 = vmax.f32 %v803, 0.0
  %v882 = vmax.f32 %v808, 0.0
  %v883 = vmax.f32 %v813, 0.0
  %v884 = vmax.f32 %v818, 0.0
  %v885 = vmax.f32 %v823, 0.0
  %v886 = vmax.f32 %v828, 0.0
  %v887 = vmax.f32 %v833, 0.0
  %v888 = vmax.f32 %v838, 0.0
  %v889 = vmax.f32 %v843, 0.0
  %v890 = vmax.f32 %v848, 0.0
  %v891 = vmax.f32 %v853, 0.0
  %v892 = vmax.f32 %v858, 0.0
  %v893 = vmax.f32 %v863, 0.0
  %v894 = vmax.f32 %v868, 0.0
  %v895 = vmax.f32 %v873, 0.0
  %v896 = vmax.f32 %v878, 0.0
  %v897 = vlaneseq
  %v898 = vshrl.u32 %v897, 7
  %v899 = vadd.s32 %v898, 8
  %v900 = vadd.s32 %v898, 16
  %v901 = vadd.s32 %v898, 24
  %v902 = vadd.s32 %v898, 32
  %v903 = vadd.s32 %v898, 40
  %v904 = vadd.s32 %v898, 48
  %v905 = vadd.s32 %v898, 56
  %v906 = vadd.s32 %v898, 64
  %v907 = vadd.s32 %v898, 72
  %v908 = vadd.s32 %v898, 80
  %v909 = vadd.s32 %v898, 88
  %v910 = vadd.s32 %v898, 96
  %v911 = vadd.s32 %v898, 104
  %v912 = vadd.s32 %v898, 112
  %v913 = vadd.s32 %v898, 120
  %vm914 = vcmp.lt.s32.totalorder %v898, 0
  %v915 = vsub.s32 0, %v898
  %v916 = vsel %vm914, %v915, %v898
  %v917 = vshrl.u32 %v916, 4
  %v918 = vand.u32 %v916, 15
  %v919 = vsub.s32 0, %v918
  %v920 = vsel %vm914, %v919, %v918
  %vm921 = vcmp.lt.s32.totalorder %v899, 0
  %v922 = vsub.s32 0, %v899
  %v923 = vsel %vm921, %v922, %v899
  %v924 = vshrl.u32 %v923, 4
  %v925 = vand.u32 %v923, 15
  %v926 = vsub.s32 0, %v925
  %v927 = vsel %vm921, %v926, %v925
  %vm928 = vcmp.lt.s32.totalorder %v900, 0
  %v929 = vsub.s32 0, %v900
  %v930 = vsel %vm928, %v929, %v900
  %v931 = vshrl.u32 %v930, 4
  %v932 = vand.u32 %v930, 15
  %v933 = vsub.s32 0, %v932
  %v934 = vsel %vm928, %v933, %v932
  %vm935 = vcmp.lt.s32.totalorder %v901, 0
  %v936 = vsub.s32 0, %v901
  %v937 = vsel %vm935, %v936, %v901
  %v938 = vshrl.u32 %v937, 4
  %v939 = vand.u32 %v937, 15
  %v940 = vsub.s32 0, %v939
  %v941 = vsel %vm935, %v940, %v939
  %vm942 = vcmp.lt.s32.totalorder %v902, 0
  %v943 = vsub.s32 0, %v902
  %v944 = vsel %vm942, %v943, %v902
  %v945 = vshrl.u32 %v944, 4
  %v946 = vand.u32 %v944, 15
  %v947 = vsub.s32 0, %v946
  %v948 = vsel %vm942, %v947, %v946
  %vm949 = vcmp.lt.s32.totalorder %v903, 0
  %v950 = vsub.s32 0, %v903
  %v951 = vsel %vm949, %v950, %v903
  %v952 = vshrl.u32 %v951, 4
  %v953 = vand.u32 %v951, 15
  %v954 = vsub.s32 0, %v953
  %v955 = vsel %vm949, %v954, %v953
  %vm956 = vcmp.lt.s32.totalorder %v904, 0
  %v957 = vsub.s32 0, %v904
  %v958 = vsel %vm956, %v957, %v904
  %v959 = vshrl.u32 %v958, 4
  %v960 = vand.u32 %v958, 15
  %v961 = vsub.s32 0, %v960
  %v962 = vsel %vm956, %v961, %v960
  %vm963 = vcmp.lt.s32.totalorder %v905, 0
  %v964 = vsub.s32 0, %v905
  %v965 = vsel %vm963, %v964, %v905
  %v966 = vshrl.u32 %v965, 4
  %v967 = vand.u32 %v965, 15
  %v968 = vsub.s32 0, %v967
  %v969 = vsel %vm963, %v968, %v967
  %vm970 = vcmp.lt.s32.totalorder %v906, 0
  %v971 = vsub.s32 0, %v906
  %v972 = vsel %vm970, %v971, %v906
  %v973 = vshrl.u32 %v972, 4
  %v974 = vand.u32 %v972, 15
  %v975 = vsub.s32 0, %v974
  %v976 = vsel %vm970, %v975, %v974
  %vm977 = vcmp.lt.s32.totalorder %v907, 0
  %v978 = vsub.s32 0, %v907
  %v979 = vsel %vm977, %v978, %v907
  %v980 = vshrl.u32 %v979, 4
  %v981 = vand.u32 %v979, 15
  %v982 = vsub.s32 0, %v981
  %v983 = vsel %vm977, %v982, %v981
  %vm984 = vcmp.lt.s32.totalorder %v908, 0
  %v985 = vsub.s32 0, %v908
  %v986 = vsel %vm984, %v985, %v908
  %v987 = vshrl.u32 %v986, 4
  %v988 = vand.u32 %v986, 15
  %v989 = vsub.s32 0, %v988
  %v990 = vsel %vm984, %v989, %v988
  %vm991 = vcmp.lt.s32.totalorder %v909, 0
  %v992 = vsub.s32 0, %v909
  %v993 = vsel %vm991, %v992, %v909
  %v994 = vshrl.u32 %v993, 4
  %v995 = vand.u32 %v993, 15
  %v996 = vsub.s32 0, %v995
  %v997 = vsel %vm991, %v996, %v995
  %vm998 = vcmp.lt.s32.totalorder %v910, 0
  %v999 = vsub.s32 0, %v910
  %v1000 = vsel %vm998, %v999, %v910
  %v1001 = vshrl.u32 %v1000, 4
  %v1002 = vand.u32 %v1000, 15
  %v1003 = vsub.s32 0, %v1002
  %v1004 = vsel %vm998, %v1003, %v1002
  %vm1005 = vcmp.lt.s32.totalorder %v911, 0
  %v1006 = vsub.s32 0, %v911
  %v1007 = vsel %vm1005, %v1006, %v911
  %v1008 = vshrl.u32 %v1007, 4
  %v1009 = vand.u32 %v1007, 15
  %v1010 = vsub.s32 0, %v1009
  %v1011 = vsel %vm1005, %v1010, %v1009
  %vm1012 = vcmp.lt.s32.totalorder %v912, 0
  %v1013 = vsub.s32 0, %v912
  %v1014 = vsel %vm1012, %v1013, %v912
  %v1015 = vshrl.u32 %v1014, 4
  %v1016 = vand.u32 %v1014, 15
  %v1017 = vsub.s32 0, %v1016
  %v1018 = vsel %vm1012, %v1017, %v1016
  %vm1019 = vcmp.lt.s32.totalorder %v913, 0
  %v1020 = vsub.s32 0, %v913
  %v1021 = vsel %vm1019, %v1020, %v913
  %v1022 = vshrl.u32 %v1021, 4
  %v1023 = vand.u32 %v1021, 15
  %v1024 = vsub.s32 0, %v1023
  %v1025 = vsel %vm1019, %v1024, %v1023
  %vm1026 = vcmp.ne.s32.totalorder %v920, 0
  %vm1027 = vcmp.ne.s32.totalorder %v927, 0
  %vm1028 = vcmp.ne.s32.totalorder %v934, 0
  %vm1029 = vcmp.ne.s32.totalorder %v941, 0
  %vm1030 = vcmp.ne.s32.totalorder %v948, 0
  %vm1031 = vcmp.ne.s32.totalorder %v955, 0
  %vm1032 = vcmp.ne.s32.totalorder %v962, 0
  %vm1033 = vcmp.ne.s32.totalorder %v969, 0
  %vm1034 = vcmp.ne.s32.totalorder %v976, 0
  %vm1035 = vcmp.ne.s32.totalorder %v983, 0
  %vm1036 = vcmp.ne.s32.totalorder %v990, 0
  %vm1037 = vcmp.ne.s32.totalorder %v997, 0
  %vm1038 = vcmp.ne.s32.totalorder %v1004, 0
  %vm1039 = vcmp.ne.s32.totalorder %v1011, 0
  %vm1040 = vcmp.ne.s32.totalorder %v1018, 0
  %vm1041 = vcmp.ne.s32.totalorder %v1025, 0
  %vm1042 = vcmp.lt.s32.totalorder %v920, 0
  %vm1043 = vcmp.lt.s32.totalorder %v927, 0
  %vm1044 = vcmp.lt.s32.totalorder %v934, 0
  %vm1045 = vcmp.lt.s32.totalorder %v941, 0
  %vm1046 = vcmp.lt.s32.totalorder %v948, 0
  %vm1047 = vcmp.lt.s32.totalorder %v955, 0
  %vm1048 = vcmp.lt.s32.totalorder %v962, 0
  %vm1049 = vcmp.lt.s32.totalorder %v969, 0
  %vm1050 = vcmp.lt.s32.totalorder %v976, 0
  %vm1051 = vcmp.lt.s32.totalorder %v983, 0
  %vm1052 = vcmp.lt.s32.totalorder %v990, 0
  %vm1053 = vcmp.lt.s32.totalorder %v997, 0
  %vm1054 = vcmp.lt.s32.totalorder %v1004, 0
  %vm1055 = vcmp.lt.s32.totalorder %v1011, 0
  %vm1056 = vcmp.lt.s32.totalorder %v1018, 0
  %vm1057 = vcmp.lt.s32.totalorder %v1025, 0
  %vm1058 = vmand %vm1042, %vm1026
  %vm1059 = vmand %vm1043, %vm1027
  %vm1060 = vmand %vm1044, %vm1028
  %vm1061 = vmand %vm1045, %vm1029
  %vm1062 = vmand %vm1046, %vm1030
  %vm1063 = vmand %vm1047, %vm1031
  %vm1064 = vmand %vm1048, %vm1032
  %vm1065 = vmand %vm1049, %vm1033
  %vm1066 = vmand %vm1050, %vm1034
  %vm1067 = vmand %vm1051, %vm1035
  %vm1068 = vmand %vm1052, %vm1036
  %vm1069 = vmand %vm1053, %vm1037
  %vm1070 = vmand %vm1054, %vm1038
  %vm1071 = vmand %vm1055, %vm1039
  %vm1072 = vmand %vm1056, %vm1040
  %vm1073 = vmand %vm1057, %vm1041
  %v1074 = vadd.s32 %v920, 16
  %v1075 = vadd.s32 %v927, 16
  %v1076 = vadd.s32 %v934, 16
  %v1077 = vadd.s32 %v941, 16
  %v1078 = vadd.s32 %v948, 16
  %v1079 = vadd.s32 %v955, 16
  %v1080 = vadd.s32 %v962, 16
  %v1081 = vadd.s32 %v969, 16
  %v1082 = vadd.s32 %v976, 16
  %v1083 = vadd.s32 %v983, 16
  %v1084 = vadd.s32 %v990, 16
  %v1085 = vadd.s32 %v997, 16
  %v1086 = vadd.s32 %v1004, 16
  %v1087 = vadd.s32 %v1011, 16
  %v1088 = vadd.s32 %v1018, 16
  %v1089 = vadd.s32 %v1025, 16
  %v1090 = vsel %vm1058, %v1074, %v920
  %v1091 = vsel %vm1059, %v1075, %v927
  %v1092 = vsel %vm1060, %v1076, %v934
  %v1093 = vsel %vm1061, %v1077, %v941
  %v1094 = vsel %vm1062, %v1078, %v948
  %v1095 = vsel %vm1063, %v1079, %v955
  %v1096 = vsel %vm1064, %v1080, %v962
  %v1097 = vsel %vm1065, %v1081, %v969
  %v1098 = vsel %vm1066, %v1082, %v976
  %v1099 = vsel %vm1067, %v1083, %v983
  %v1100 = vsel %vm1068, %v1084, %v990
  %v1101 = vsel %vm1069, %v1085, %v997
  %v1102 = vsel %vm1070, %v1086, %v1004
  %v1103 = vsel %vm1071, %v1087, %v1011
  %v1104 = vsel %vm1072, %v1088, %v1018
  %v1105 = vsel %vm1073, %v1089, %v1025
  %v1106 = vcvt.s32.f32 %v1090
  %v1107 = vcvt.s32.f32 %v1091
  %v1108 = vcvt.s32.f32 %v1092
  %v1109 = vcvt.s32.f32 %v1093
  %v1110 = vcvt.s32.f32 %v1094
  %v1111 = vcvt.s32.f32 %v1095
  %v1112 = vcvt.s32.f32 %v1096
  %v1113 = vcvt.s32.f32 %v1097
  %v1114 = vcvt.s32.f32 %v1098
  %v1115 = vcvt.s32.f32 %v1099
  %v1116 = vcvt.s32.f32 %v1100
  %v1117 = vcvt.s32.f32 %v1101
  %v1118 = vcvt.s32.f32 %v1102
  %v1119 = vcvt.s32.f32 %v1103
  %v1120 = vcvt.s32.f32 %v1104
  %v1121 = vcvt.s32.f32 %v1105
  %v1122 = vld [vmem:[%s2 + $0x1] sm:$0x1]
  %v1123 = vlaneseq
  %v1124 = vshrl.u32 %v1123, 7
  %v1125 = vsub.s32 0, %v1124
  %v1126 = vrot.slane %v1122, %v1125
  %vm1127 = vcmp.lt.f32.partialorder %v1106, %v1126
  %vm1128 = vcmp.lt.f32.partialorder %v1107, %v1126
  %vm1129 = vcmp.lt.f32.partialorder %v1108, %v1126
  %vm1130 = vcmp.lt.f32.partialorder %v1109, %v1126
  %vm1131 = vcmp.lt.f32.partialorder %v1110, %v1126
  %vm1132 = vcmp.lt.f32.partialorder %v1111, %v1126
  %vm1133 = vcmp.lt.f32.partialorder %v1112, %v1126
  %vm1134 = vcmp.lt.f32.partialorder %v1113, %v1126
  %vm1135 = vcmp.lt.f32.partialorder %v1114, %v1126
  %vm1136 = vcmp.lt.f32.partialorder %v1115, %v1126
  %vm1137 = vcmp.lt.f32.partialorder %v1116, %v1126
  %vm1138 = vcmp.lt.f32.partialorder %v1117, %v1126
  %vm1139 = vcmp.lt.f32.partialorder %v1118, %v1126
  %vm1140 = vcmp.lt.f32.partialorder %v1119, %v1126
  %vm1141 = vcmp.lt.f32.partialorder %v1120, %v1126
  %vm1142 = vcmp.lt.f32.partialorder %v1121, %v1126
  %v1143 = vsel %vm1127, %v881, -1e+30
  %v1144 = vsel %vm1128, %v882, -1e+30
  %v1145 = vsel %vm1129, %v883, -1e+30
  %v1146 = vsel %vm1130, %v884, -1e+30
  %v1147 = vsel %vm1131, %v885, -1e+30
  %v1148 = vsel %vm1132, %v886, -1e+30
  %v1149 = vsel %vm1133, %v887, -1e+30
  %v1150 = vsel %vm1134, %v888, -1e+30
  %v1151 = vsel %vm1135, %v889, -1e+30
  %v1152 = vsel %vm1136, %v890, -1e+30
  %v1153 = vsel %vm1137, %v891, -1e+30
  %v1154 = vsel %vm1138, %v892, -1e+30
  %v1155 = vsel %vm1139, %v893, -1e+30
  %v1156 = vsel %vm1140, %v894, -1e+30
  %v1157 = vsel %vm1141, %v895, -1e+30
  %v1158 = vsel %vm1142, %v896, -1e+30
  %v1159 = vmax.f32 %v1143, %v1144
  %v1160 = vrot.slane %v1159, 4
  %v1161 = vmax.f32 %v1159, %v1160
  %v1162 = vrot.slane %v1161, 2
  %v1163 = vmax.f32 %v1161, %v1162
  %v1164 = vrot.slane %v1163, 1
  %v1165 = vmax.f32 %v1163, %v1164
  %v1166 = vmax.f32 %v1145, %v1146
  %v1167 = vrot.slane %v1166, 4
  %v1168 = vmax.f32 %v1166, %v1167
  %v1169 = vrot.slane %v1168, 2
  %v1170 = vmax.f32 %v1168, %v1169
  %v1171 = vrot.slane %v1170, 1
  %v1172 = vmax.f32 %v1170, %v1171
  %v1173 = vmax.f32 %v1147, %v1148
  %v1174 = vrot.slane %v1173, 4
  %v1175 = vmax.f32 %v1173, %v1174
  %v1176 = vrot.slane %v1175, 2
  %v1177 = vmax.f32 %v1175, %v1176
  %v1178 = vrot.slane %v1177, 1
  %v1179 = vmax.f32 %v1177, %v1178
  %v1180 = vmax.f32 %v1149, %v1150
  %v1181 = vrot.slane %v1180, 4
  %v1182 = vmax.f32 %v1180, %v1181
  %v1183 = vrot.slane %v1182, 2
  %v1184 = vmax.f32 %v1182, %v1183
  %v1185 = vrot.slane %v1184, 1
  %v1186 = vmax.f32 %v1184, %v1185
  %v1187 = vmax.f32 %v1151, %v1152
  %v1188 = vrot.slane %v1187, 4
  %v1189 = vmax.f32 %v1187, %v1188
  %v1190 = vrot.slane %v1189, 2
  %v1191 = vmax.f32 %v1189, %v1190
  %v1192 = vrot.slane %v1191, 1
  %v1193 = vmax.f32 %v1191, %v1192
  %v1194 = vmax.f32 %v1153, %v1154
  %v1195 = vrot.slane %v1194, 4
  %v1196 = vmax.f32 %v1194, %v1195
  %v1197 = vrot.slane %v1196, 2
  %v1198 = vmax.f32 %v1196, %v1197
  %v1199 = vrot.slane %v1198, 1
  %v1200 = vmax.f32 %v1198, %v1199
  %v1201 = vmax.f32 %v1155, %v1156
  %v1202 = vrot.slane %v1201, 4
  %v1203 = vmax.f32 %v1201, %v1202
  %v1204 = vrot.slane %v1203, 2
  %v1205 = vmax.f32 %v1203, %v1204
  %v1206 = vrot.slane %v1205, 1
  %v1207 = vmax.f32 %v1205, %v1206
  %v1208 = vmax.f32 %v1157, %v1158
  %v1209 = vrot.slane %v1208, 4
  %v1210 = vmax.f32 %v1208, %v1209
  %v1211 = vrot.slane %v1210, 2
  %v1212 = vmax.f32 %v1210, %v1211
  %v1213 = vrot.slane %v1212, 1
  %v1214 = vmax.f32 %v1212, %v1213
  %v1215 = vld [vmem:[%s3] sm:$0xff]
  %v1216 = vld [vmem:[%s3 + $0x8] sm:$0xff]
  %v1217 = vld [vmem:[%s3 + $0x10] sm:$0xff]
  %v1218 = vld [vmem:[%s3 + $0x18] sm:$0xff]
  %v1219 = vld [vmem:[%s3 + $0x20] sm:$0xff]
  %v1220 = vld [vmem:[%s3 + $0x28] sm:$0xff]
  %v1221 = vld [vmem:[%s3 + $0x30] sm:$0xff]
  %v1222 = vld [vmem:[%s3 + $0x38] sm:$0xff]
  %v1223 = vld [vmem:[%s3 + $0x40] sm:$0xff]
  %v1224 = vld [vmem:[%s3 + $0x48] sm:$0xff]
  %v1225 = vld [vmem:[%s3 + $0x50] sm:$0xff]
  %v1226 = vld [vmem:[%s3 + $0x58] sm:$0xff]
  %v1227 = vld [vmem:[%s3 + $0x60] sm:$0xff]
  %v1228 = vld [vmem:[%s3 + $0x68] sm:$0xff]
  %v1229 = vld [vmem:[%s3 + $0x70] sm:$0xff]
  %v1230 = vld [vmem:[%s3 + $0x78] sm:$0xff]
  %v1231 = vld [vmem:[%s2 + $0x2] sm:$0x1]
  %v1232 = vlaneseq
  %v1233 = vshrl.u32 %v1232, 7
  %v1234 = vsub.s32 0, %v1233
  %v1235 = vrot.slane %v1231, %v1234
  %vm1244 = vcmask 1041409
  %v1245 = vsel %vm1244, %v1172, %v1165
  %vm1246 = vcmask 1042434
  %v1247 = vsel %vm1246, %v1179, %v1245
  %vm1248 = vcmask 1043459
  %v1249 = vsel %vm1248, %v1186, %v1247
  %vm1250 = vcmask 1044484
  %v1251 = vsel %vm1250, %v1193, %v1249
  %vm1252 = vcmask 1045509
  %v1253 = vsel %vm1252, %v1200, %v1251
  %vm1254 = vcmask 1046534
  %v1255 = vsel %vm1254, %v1207, %v1253
  %vm1256 = vcmask 1047559
  %v1257 = vsel %vm1256, %v1214, %v1255
  %1259 = vmatprep.subr.mxu0 0.0
  %1260 = vmatpush1.msra.mxu0 %v1215
  %1261 = vmatprep.subr.mxu0 0.0
  %1262 = vmatpush1.msra.mxu0 %v1216
  %1263 = vmatprep.subr.mxu0 0.0
  %1264 = vmatpush1.msra.mxu0 %v1217
  %1265 = vmatprep.subr.mxu0 0.0
  %1266 = vmatpush1.msra.mxu0 %v1218
  %1267 = vmatprep.subr.mxu0 0.0
  %1268 = vmatpush1.msra.mxu0 %v1219
  %1269 = vmatprep.subr.mxu0 0.0
  %1270 = vmatpush1.msra.mxu0 %v1220
  %1271 = vmatprep.subr.mxu0 0.0
  %1272 = vmatpush1.msra.mxu0 %v1221
  %1273 = vmatprep.subr.mxu0 0.0
  %1274 = vmatpush1.msra.mxu0 %v1222
  %1275 = vmatprep.subr.mxu0 0.0
  %1276 = vmatpush1.msra.mxu0 %v1223
  %1277 = vmatprep.subr.mxu0 0.0
  %1278 = vmatpush1.msra.mxu0 %v1224
  %1279 = vmatprep.subr.mxu0 0.0
  %1280 = vmatpush1.msra.mxu0 %v1225
  %1281 = vmatprep.subr.mxu0 0.0
  %1282 = vmatpush1.msra.mxu0 %v1226
  %1283 = vmatprep.subr.mxu0 0.0
  %1284 = vmatpush1.msra.mxu0 %v1227
  %1285 = vmatprep.subr.mxu0 0.0
  %1286 = vmatpush1.msra.mxu0 %v1228
  %1287 = vmatprep.subr.mxu0 0.0
  %1288 = vmatpush1.msra.mxu0 %v1229
  %1289 = vmatprep.subr.mxu0 0.0
  %1290 = vmatpush1.msra.mxu0 %v1230
  %1291 = vmatprep.subr.mxu0 0.0
  %1292 = vmatpush1.msra.mxu0 0.0
  %1293 = vmatprep.subr.mxu0 0.0
  %1294 = vmatpush1.msra.mxu0 0.0
  %1295 = vmatprep.subr.mxu0 0.0
  %1296 = vmatpush1.msra.mxu0 0.0
  %1297 = vmatprep.subr.mxu0 0.0
  %1298 = vmatpush1.msra.mxu0 0.0
  %1299 = vmatprep.subr.mxu0 0.0
  %1300 = vmatpush1.msra.mxu0 0.0
  %1301 = vmatprep.subr.mxu0 0.0
  %1302 = vmatpush1.msra.mxu0 0.0
  %1303 = vmatprep.subr.mxu0 0.0
  %1304 = vmatpush1.msra.mxu0 0.0
  %1305 = vmatprep.subr.mxu0 0.0
  %1306 = vmatpush1.msra.mxu0 0.0
  %1307 = vmatprep.subr.mxu0 0.0
  %1308 = vmatpush1.msra.mxu0 0.0
  %1309 = vmatprep.subr.mxu0 0.0
  %1310 = vmatpush1.msra.mxu0 0.0
  %1311 = vmatprep.subr.mxu0 0.0
  %1312 = vmatpush1.msra.mxu0 0.0
  %1313 = vmatprep.subr.mxu0 0.0
  %1314 = vmatpush1.msra.mxu0 0.0
  %1315 = vmatprep.subr.mxu0 0.0
  %1316 = vmatpush1.msra.mxu0 0.0
  %1317 = vmatprep.subr.mxu0 0.0
  %1318 = vmatpush1.msra.mxu0 0.0
  %1319 = vmatprep.subr.mxu0 0.0
  %1320 = vmatpush1.msra.mxu0 0.0
  %1321 = vmatprep.subr.mxu0 0.0
  %1322 = vmatpush1.msra.mxu0 0.0
  %1323 = vmatprep.mubr.f32.mxu0 0.0
  %1324 = vmatmul.mubr.f32.gmra.mrb[0].mxu0 %v1257
  %v1325 = vpop.f32.mrb[0].mxu0
  %v1326 = vadd.f32 %v1235, %v1325
  %v1327 = vpop.f32.mrb[0].mxu0
  %1328 = vdwg.mxu0
  %v1329 = vmax.f32 %v1326, 0.0
  %v1330 = vld [vmem:[%s4] sm:$0xff]
  %v1331 = vld [vmem:[%s4 + $0x8] sm:$0xff]
  %v1332 = vld [vmem:[%s4 + $0x10] sm:$0xff]
  %v1333 = vld [vmem:[%s4 + $0x18] sm:$0xff]
  %v1334 = vld [vmem:[%s4 + $0x20] sm:$0xff]
  %v1335 = vld [vmem:[%s4 + $0x28] sm:$0xff]
  %v1336 = vld [vmem:[%s4 + $0x30] sm:$0xff]
  %v1337 = vld [vmem:[%s4 + $0x38] sm:$0xff]
  %v1338 = vld [vmem:[%s4 + $0x40] sm:$0xff]
  %v1339 = vld [vmem:[%s4 + $0x48] sm:$0xff]
  %v1340 = vld [vmem:[%s4 + $0x50] sm:$0xff]
  %v1341 = vld [vmem:[%s4 + $0x58] sm:$0xff]
  %v1342 = vld [vmem:[%s4 + $0x60] sm:$0xff]
  %v1343 = vld [vmem:[%s4 + $0x68] sm:$0xff]
  %v1344 = vld [vmem:[%s4 + $0x70] sm:$0xff]
  %v1345 = vld [vmem:[%s4 + $0x78] sm:$0xff]
  %v1346 = vld [vmem:[%s2 + $0x3] sm:$0x1]
  %v1347 = vlaneseq
  %v1348 = vshrl.u32 %v1347, 7
  %v1349 = vsub.s32 0, %v1348
  %v1350 = vrot.slane %v1346, %v1349
  %1351 = vmatprep.subr.mxu0 0.0
  %1352 = vmatpush1.msra.mxu0 %v1330
  %1353 = vmatprep.subr.mxu0 0.0
  %1354 = vmatpush1.msra.mxu0 %v1331
  %1355 = vmatprep.subr.mxu0 0.0
  %1356 = vmatpush1.msra.mxu0 %v1332
  %1357 = vmatprep.subr.mxu0 0.0
  %1358 = vmatpush1.msra.mxu0 %v1333
  %1359 = vmatprep.subr.mxu0 0.0
  %1360 = vmatpush1.msra.mxu0 %v1334
  %1361 = vmatprep.subr.mxu0 0.0
  %1362 = vmatpush1.msra.mxu0 %v1335
  %1363 = vmatprep.subr.mxu0 0.0
  %1364 = vmatpush1.msra.mxu0 %v1336
  %1365 = vmatprep.subr.mxu0 0.0
  %1366 = vmatpush1.msra.mxu0 %v1337
  %1367 = vmatprep.subr.mxu0 0.0
  %1368 = vmatpush1.msra.mxu0 %v1338
  %1369 = vmatprep.subr.mxu0 0.0
  %1370 = vmatpush1.msra.mxu0 %v1339
  %1371 = vmatprep.subr.mxu0 0.0
  %1372 = vmatpush1.msra.mxu0 %v1340
  %1373 = vmatprep.subr.mxu0 0.0
  %1374 = vmatpush1.msra.mxu0 %v1341
  %1375 = vmatprep.subr.mxu0 0.0
  %1376 = vmatpush1.msra.mxu0 %v1342
  %1377 = vmatprep.subr.mxu0 0.0
  %1378 = vmatpush1.msra.mxu0 %v1343
  %1379 = vmatprep.subr.mxu0 0.0
  %1380 = vmatpush1.msra.mxu0 %v1344
  %1381 = vmatprep.subr.mxu0 0.0
  %1382 = vmatpush1.msra.mxu0 %v1345
  %1383 = vmatprep.subr.mxu0 0.0
  %1384 = vmatpush1.msra.mxu0 0.0
  %1385 = vmatprep.subr.mxu0 0.0
  %1386 = vmatpush1.msra.mxu0 0.0
  %1387 = vmatprep.subr.mxu0 0.0
  %1388 = vmatpush1.msra.mxu0 0.0
  %1389 = vmatprep.subr.mxu0 0.0
  %1390 = vmatpush1.msra.mxu0 0.0
  %1391 = vmatprep.subr.mxu0 0.0
  %1392 = vmatpush1.msra.mxu0 0.0
  %1393 = vmatprep.subr.mxu0 0.0
  %1394 = vmatpush1.msra.mxu0 0.0
  %1395 = vmatprep.subr.mxu0 0.0
  %1396 = vmatpush1.msra.mxu0 0.0
  %1397 = vmatprep.subr.mxu0 0.0
  %1398 = vmatpush1.msra.mxu0 0.0
  %1399 = vmatprep.subr.mxu0 0.0
  %1400 = vmatpush1.msra.mxu0 0.0
  %1401 = vmatprep.subr.mxu0 0.0
  %1402 = vmatpush1.msra.mxu0 0.0
  %1403 = vmatprep.subr.mxu0 0.0
  %1404 = vmatpush1.msra.mxu0 0.0
  %1405 = vmatprep.subr.mxu0 0.0
  %1406 = vmatpush1.msra.mxu0 0.0
  %1407 = vmatprep.subr.mxu0 0.0
  %1408 = vmatpush1.msra.mxu0 0.0
  %1409 = vmatprep.subr.mxu0 0.0
  %1410 = vmatpush1.msra.mxu0 0.0
  %1411 = vmatprep.subr.mxu0 0.0
  %1412 = vmatpush1.msra.mxu0 0.0
  %1413 = vmatprep.subr.mxu0 0.0
  %1414 = vmatpush1.msra.mxu0 0.0
  %1415 = vmatprep.mubr.f32.mxu0 0.0
  %1416 = vmatmul.mubr.f32.gmra.mrb[0].mxu0 %v1329
  %v1417 = vpop.f32.mrb[0].mxu0
  %v1418 = vadd.f32 %v1350, %v1417
  %v1419 = vpop.f32.mrb[0].mxu0
  %1420 = vdwg.mxu0
  %1421 = vst [vmem:[%s5] sm:$0xff] %v1418
  // Predicated region
  $region22: #{cnn_forward.1} parent=0 // pred_check
    _
  $region23: #{cnn_forward.1} parent=0 // pred_check_branch
    %1423 = sbr.rel (0) target = $region25
  $region24: #{cnn_forward.1} parent=0 // pred_region
    _
  $region25: #{cnn_forward.1} parent=0 // pred_fallthru
    _
  // Predicated region
  $region26: #{cnn_forward.1} parent=0 // pred_check
    _
  $region27: #{cnn_forward.1} parent=0 // pred_check_branch
    %1425 = sbr.rel (0) target = $region29
  $region28: #{cnn_forward.1} parent=0 // pred_region
    _
  $region29: #{cnn_forward.1} parent=0 // pred_fallthru
    _

</llo_original>
